<compile_context>
chip_gen: v5e
topology: v5e:2x2
jax: 0.10.0
libtpu: 0.0.40
codegen_flags: <defaults>
</compile_context>

<pallas_src>
import functools

import jax
import jax.numpy as jnp
import numpy as np
from jax import lax
from jax.experimental import pallas as pl


# ----------------- stage 1: fc1 + fc2 + convT1 (Cin=1) + bn1 -----------------
def _stage1_kernel(zt_ref, w1_ref, b1_ref, w2_ref, b2_ref,
                   wc_ref, bc_ref, pool_ref, g_ref, beta_ref, o_ref,
                   *, batch, lin, q, ksplit, sc, count, eps):
    # fc1 / fc2, computed transposed (features on sublanes, batch on lanes) so
    # the conv below can slice per-batch columns without any in-kernel transpose.
    l1t = jnp.dot(w1_ref[...], zt_ref[...],
                  preferred_element_type=jnp.float32) + b1_ref[...]
    l2t = jnp.dot(w2_ref[...], l1t,
                  preferred_element_type=jnp.float32) + b2_ref[...]     # (lin, batch)

    # ConvTranspose1d with Cin == 1: VPU outer product (skip the MXU), then a
    # sliced overlap-add of the K//stride taps directly into the output ref.
    o_ref[...] = jnp.zeros_like(o_ref)
    for b in range(batch):
        p = l2t[:, b:b + 1] * wc_ref[...]                 # (lin, ksplit*sc)
        for m in range(ksplit):
            r0 = b * q + m
            o_ref[r0:r0 + lin, :] = o_ref[r0:r0 + lin, :] + p[:, m * sc:(m + 1) * sc]

    y = o_ref[...] + bc_ref[...]                          # conv bias (tiled per column)

    # BatchNorm1d (training mode, biased variance) in the blocked lane-dense
    # layout.  pool_ref is the (sc, sc) same-channel indicator matrix.
    colsum = jnp.sum(y, axis=0, keepdims=True)
    colsq = jnp.sum(y * y, axis=0, keepdims=True)
    mean = jnp.dot(colsum, pool_ref[...], preferred_element_type=jnp.float32) * (1.0 / count)
    msq = jnp.dot(colsq, pool_ref[...], preferred_element_type=jnp.float32) * (1.0 / count)
    inv = lax.rsqrt(msq - mean * mean + eps)
    o_ref[...] = (y - mean) * (inv * g_ref[...]) + beta_ref[...]


# -------------------------- stage 2: convT2 + bn2 ----------------------------
def _stage2_kernel(x_ref, wc_ref, bc_ref, pool_ref, g_ref, beta_ref, o_ref,
                   *, batch, lin, q, ksplit, sc, count, eps):
    o_ref[...] = jnp.zeros_like(o_ref)
    for b in range(batch):
        p = jnp.dot(x_ref[b], wc_ref[...],
                    preferred_element_type=jnp.float32)   # (lin, ksplit*sc)
        for m in range(ksplit):
            r0 = b * q + m
            o_ref[r0:r0 + lin, :] = o_ref[r0:r0 + lin, :] + p[:, m * sc:(m + 1) * sc]

    y = o_ref[...] + bc_ref[...]
    colsum = jnp.sum(y, axis=0, keepdims=True)
    colsq = jnp.sum(y * y, axis=0, keepdims=True)
    mean = jnp.dot(colsum, pool_ref[...], preferred_element_type=jnp.float32) * (1.0 / count)
    msq = jnp.dot(colsq, pool_ref[...], preferred_element_type=jnp.float32) * (1.0 / count)
    inv = lax.rsqrt(msq - mean * mean + eps)
    o_ref[...] = (y - mean) * (inv * g_ref[...]) + beta_ref[...]


# ----------------------- one-time parameter preparation ----------------------
def prepare_params(params, *, kernel_size, stride):
    """Preprocess PyTorch-layout parameters into kernel-friendly layouts (once)."""
    assert kernel_size % stride == 0 and kernel_size >= stride
    ksplit = kernel_size // stride

    def convt_flat(w):            # (Cin, Cout, K) -> (Cin, ksplit*stride*Cout)
        cin, cout, _ = w.shape
        return jnp.transpose(w.reshape(cin, cout, ksplit, stride),
                             (0, 2, 3, 1)).reshape(cin, ksplit * stride * cout)

    def tiled(v):                 # (C,) -> (1, stride*C), column r*C+c == v[c]
        return jnp.tile(v, stride).reshape(1, stride * v.shape[0])

    def pool_mat(cout):           # same-channel indicator over blocked columns
        idx = jnp.arange(stride * cout)
        return (idx[:, None] % cout == idx[None, :] % cout).astype(jnp.float32)

    cout1 = params["conv1_w"].shape[1]
    cout2 = params["conv2_w"].shape[1]
    return {
        "fc1_w": params["fc1_w"],
        "fc1_b": params["fc1_b"].reshape(-1, 1),
        "fc2_w": params["fc2_w"],
        "fc2_b": params["fc2_b"].reshape(-1, 1),
        "conv1_w": convt_flat(params["conv1_w"]),     # (1, ksplit*stride*Cout1)
        "conv1_b": tiled(params["conv1_b"]),
        "conv2_w": convt_flat(params["conv2_w"]),     # (Cout1, ksplit*stride*Cout2)
        "conv2_b": tiled(params["conv2_b"]),
        "bn1_pool": pool_mat(cout1),
        "bn1_g": tiled(params["bn1_g"]),
        "bn1_b": tiled(params["bn1_b"]),
        "bn2_pool": pool_mat(cout2),
        "bn2_g": tiled(params["bn2_g"]),
        "bn2_b": tiled(params["bn2_b"]),
    }


# ------------------------------ Decoder forward ------------------------------
def decoder_forward(z, prep, *, kernel_size, stride):
    batch = z.shape[0]
    ksplit = kernel_size // stride

    cout1 = prep["conv1_w"].shape[1] // (ksplit * stride)
    cout2 = prep["conv2_w"].shape[1] // (ksplit * stride)
    sc1, sc2 = stride * cout1, stride * cout2

    lin1 = prep["fc2_w"].shape[0]          # length fed to convT1 (view(B, 1, -1))
    q1 = lin1 + ksplit - 1
    lout1 = q1 * stride                    # == (lin1 - 1)*stride + kernel_size
    q2 = lout1 + ksplit - 1
    lout2 = q2 * stride

    zt = jnp.transpose(z)                  # tiny (d_in, B); keeps the kernel transpose-free

    # ---- stage 1: fc1 -> fc2 -> convT1 -> bn1 (single fused kernel) ----
    k1 = functools.partial(_stage1_kernel, batch=batch, lin=lin1, q=q1,
                           ksplit=ksplit, sc=sc1,
                           count=float(batch * lout1), eps=1e-5)
    y1_blk = pl.pallas_call(
        k1, out_shape=jax.ShapeDtypeStruct((batch * q1, sc1), jnp.float32),
    )(zt, prep["fc1_w"], prep["fc1_b"], prep["fc2_w"], prep["fc2_b"],
      prep["conv1_w"], prep["conv1_b"],
      prep["bn1_pool"], prep["bn1_g"], prep["bn1_b"])

    # blocked (B*Q1, stride*Cout1) -> NLC (B, Lout1, Cout1): pure (free) reshape
    x2 = y1_blk.reshape(batch, lout1, cout1)

    # ---- stage 2: convT2 -> bn2 (single fused kernel) ----
    k2 = functools.partial(_stage2_kernel, batch=batch, lin=lout1, q=q2,
                           ksplit=ksplit, sc=sc2,
                           count=float(batch * lout2), eps=1e-5)
    y2_blk = pl.pallas_call(
        k2, out_shape=jax.ShapeDtypeStruct((batch * q2, sc2), jnp.float32),
    )(x2, prep["conv2_w"], prep["conv2_b"],
      prep["bn2_pool"], prep["bn2_g"], prep["bn2_b"])

    # blocked -> NLC (free reshape), then back to the PyTorch NCL convention
    return jnp.transpose(y2_blk.reshape(batch, lout2, cout2), (0, 2, 1))


# ------------------------------ numpy reference -------------------------------
def _ref_forward(z, p, kernel_size, stride, eps=1e-5):
    pf = {k: np.asarray(v, np.float64) for k, v in p.items()}
    z = np.asarray(z, np.float64)
    l1 = z @ pf["fc1_w"].T + pf["fc1_b"]
    l2 = l1 @ pf["fc2_w"].T + pf["fc2_b"]
    x = l2.reshape(l2.shape[0], 1, -1)                     # NCL

    def convT(x_ncl, w, b):
        B, Cin, Lin = x_ncl.shape
        _, Cout, K = w.shape
        y = np.zeros((B, Cout, (Lin - 1) * stride + K))
        for i in range(Lin):
            y[:, :, i * stride:i * stride + K] += np.einsum(
                "nc,cdj->ndj", x_ncl[:, :, i], w)
        return y + b[None, :, None]

    def bn(x_ncl, g, bb):
        mean = x_ncl.mean(axis=(0, 2), keepdims=True)
        var = x_ncl.var(axis=(0, 2), keepdims=True)
        return (x_ncl - mean) / np.sqrt(var + eps) * g[None, :, None] + bb[None, :, None]

    y1 = bn(convT(x, pf["conv1_w"], pf["conv1_b"]), pf["bn1_g"], pf["bn1_b"])
    y2 = bn(convT(y1, pf["conv2_w"], pf["conv2_b"]), pf["bn2_g"], pf["bn2_b"])
    return y2


# ------------------------------------ main ------------------------------------
if __name__ == "__main__":
    in_channel = 4
    out_channel_lst = [8, 1]          # out_channel_lst[1] must be 1 (see view(B,1,-1))
    kernel_size = 16
    stride = 8
    batch = 2

    after_1 = (2000 - kernel_size) // stride + 1           # 249
    after_2 = (after_1 - kernel_size) // stride + 1        # 30
    d_in, d_mid, d_out = after_2 // 4, after_2 // 2, after_2

    key = jax.random.PRNGKey(0)
    ks = jax.random.split(key, 16)

    def u(k, shape, fan_in):
        lim = 1.0 / (fan_in ** 0.5)
        return jax.random.uniform(k, shape, jnp.float32, -lim, lim)

    params = {
        "fc1_w": u(ks[0], (d_mid, d_in), d_in),
        "fc1_b": u(ks[1], (d_mid,), d_in),
        "fc2_w": u(ks[2], (d_out, d_mid), d_mid),
        "fc2_b": u(ks[3], (d_out,), d_mid),
        # torch ConvTranspose1d weight layout: (in_channels, out_channels, K)
        "conv1_w": u(ks[4], (out_channel_lst[1], out_channel_lst[0], kernel_size),
                     out_channel_lst[1] * kernel_size),
        "conv1_b": u(ks[5], (out_channel_lst[0],), out_channel_lst[1] * kernel_size),
        "conv2_w": u(ks[6], (out_channel_lst[0], in_channel, kernel_size),
                     out_channel_lst[0] * kernel_size),
        "conv2_b": u(ks[7], (in_channel,), out_channel_lst[0] * kernel_size),
        "bn1_g": jnp.ones((out_channel_lst[0],), jnp.float32),
        "bn1_b": jnp.zeros((out_channel_lst[0],), jnp.float32),
        "bn2_g": jnp.ones((in_channel,), jnp.float32),
        "bn2_b": jnp.zeros((in_channel,), jnp.float32),
    }

    z = jax.random.normal(ks[8], (batch, d_in), jnp.float32)

    prep = prepare_params(params, kernel_size=kernel_size, stride=stride)
    fwd = jax.jit(functools.partial(decoder_forward,
                                    kernel_size=kernel_size, stride=stride))
    out = jax.block_until_ready(fwd(z, prep))

    L1 = (after_2 - 1) * stride + kernel_size              # 248
    L2 = (L1 - 1) * stride + kernel_size                   # 1992
    assert out.shape == (batch, in_channel, L2), out.shape

    ref = _ref_forward(z, params, kernel_size, stride)
    np.testing.assert_allclose(np.asarray(out), ref, rtol=1e-2, atol=1e-2)

    print("KERNEL_OK")
</pallas_src>

<mosaic_0001>
module attributes {stable_mosaic.version = 11 : i64} {
  func.func @_stage2_kernel(%arg0: memref<2x248x8xf32, #tpu.memory_space<vmem>>, %arg1: memref<8x64xf32, #tpu.memory_space<vmem>>, %arg2: memref<1x32xf32, #tpu.memory_space<vmem>>, %arg3: memref<32x32xf32, #tpu.memory_space<vmem>>, %arg4: memref<1x32xf32, #tpu.memory_space<vmem>>, %arg5: memref<1x32xf32, #tpu.memory_space<vmem>>, %arg6: memref<498x32xf32, #tpu.memory_space<vmem>>) attributes {dimension_semantics = [], scalar_prefetch = 0 : i64, scratch_operands = 0 : i64, tpu.core_type = #tpu.core_type<tc>} {
    %cst = arith.constant 0.000000e+00 : f32
    %0 = vector.broadcast %cst : f32 to vector<498x32xf32>
    %c0 = arith.constant 0 : index
    %c0_0 = arith.constant 0 : index
    %1 = vector.load %arg6[%c0, %c0_0] : memref<498x32xf32, #tpu.memory_space<vmem>>, vector<498x32xf32>
    tpu.vector_store %arg6[%c0, %c0_0], %0 {strides = array<i32>} : memref<498x32xf32, #tpu.memory_space<vmem>>, vector<498x32xf32>,
    %c0_1 = arith.constant 0 : index
    %c0_2 = arith.constant 0 : index
    %c0_3 = arith.constant 0 : index
    %2 = vector.load %arg0[%c0_1, %c0_2, %c0_3] : memref<2x248x8xf32, #tpu.memory_space<vmem>>, vector<1x248x8xf32>
    %3 = vector.shape_cast %2 : vector<1x248x8xf32> to vector<248x8xf32>
    %c0_4 = arith.constant 0 : index
    %c0_5 = arith.constant 0 : index
    %4 = vector.load %arg1[%c0_4, %c0_5] : memref<8x64xf32, #tpu.memory_space<vmem>>, vector<8x64xf32>
    %cst_6 = arith.constant dense<0.000000e+00> : vector<248x64xf32>
    %5 = tpu.matmul %3, %4, %cst_6 {dimension_numbers = #tpu.dot_dimension_numbers<[1], [0], [0], [1], [0, 0, 1, 1], [], []>} : vector<248x8xf32>, vector<8x64xf32>, vector<248x64xf32> -> vector<248x64xf32>
    %c0_7 = arith.constant 0 : index
    %c0_8 = arith.constant 0 : index
    %6 = vector.load %arg6[%c0_7, %c0_8] : memref<498x32xf32, #tpu.memory_space<vmem>>, vector<248x32xf32>
    %7 = vector.extract_strided_slice %5 {offsets = [0, 0], sizes = [248, 32], strides = [1, 1]} : vector<248x64xf32> to vector<248x32xf32>
    %8 = arith.addf %6, %7 : vector<248x32xf32>
    %c0_9 = arith.constant 0 : index
    %c0_10 = arith.constant 0 : index
    %9 = vector.load %arg6[%c0_9, %c0_10] : memref<498x32xf32, #tpu.memory_space<vmem>>, vector<248x32xf32>
    tpu.vector_store %arg6[%c0_9, %c0_10], %8 {strides = array<i32>} : memref<498x32xf32, #tpu.memory_space<vmem>>, vector<248x32xf32>,
    %c1 = arith.constant 1 : index
    %c0_11 = arith.constant 0 : index
    %10 = vector.load %arg6[%c1, %c0_11] : memref<498x32xf32, #tpu.memory_space<vmem>>, vector<248x32xf32>
    %11 = vector.extract_strided_slice %5 {offsets = [0, 32], sizes = [248, 32], strides = [1, 1]} : vector<248x64xf32> to vector<248x32xf32>
    %12 = arith.addf %10, %11 : vector<248x32xf32>
    %c1_12 = arith.constant 1 : index
    %c0_13 = arith.constant 0 : index
    %13 = vector.load %arg6[%c1_12, %c0_13] : memref<498x32xf32, #tpu.memory_space<vmem>>, vector<248x32xf32>
    tpu.vector_store %arg6[%c1_12, %c0_13], %12 {strides = array<i32>} : memref<498x32xf32, #tpu.memory_space<vmem>>, vector<248x32xf32>,
    %c1_14 = arith.constant 1 : index
    %c0_15 = arith.constant 0 : index
    %c0_16 = arith.constant 0 : index
    %14 = vector.load %arg0[%c1_14, %c0_15, %c0_16] : memref<2x248x8xf32, #tpu.memory_space<vmem>>, vector<1x248x8xf32>
    %15 = vector.shape_cast %14 : vector<1x248x8xf32> to vector<248x8xf32>
    %c0_17 = arith.constant 0 : index
    %c0_18 = arith.constant 0 : index
    %16 = vector.load %arg1[%c0_17, %c0_18] : memref<8x64xf32, #tpu.memory_space<vmem>>, vector<8x64xf32>
    %cst_19 = arith.constant dense<0.000000e+00> : vector<248x64xf32>
    %17 = tpu.matmul %15, %16, %cst_19 {dimension_numbers = #tpu.dot_dimension_numbers<[1], [0], [0], [1], [0, 0, 1, 1], [], []>} : vector<248x8xf32>, vector<8x64xf32>, vector<248x64xf32> -> vector<248x64xf32>
    %c249 = arith.constant 249 : index
    %c0_20 = arith.constant 0 : index
    %18 = vector.load %arg6[%c249, %c0_20] : memref<498x32xf32, #tpu.memory_space<vmem>>, vector<248x32xf32>
    %19 = vector.extract_strided_slice %17 {offsets = [0, 0], sizes = [248, 32], strides = [1, 1]} : vector<248x64xf32> to vector<248x32xf32>
    %20 = arith.addf %18, %19 : vector<248x32xf32>
    %c249_21 = arith.constant 249 : index
    %c0_22 = arith.constant 0 : index
    %21 = vector.load %arg6[%c249_21, %c0_22] : memref<498x32xf32, #tpu.memory_space<vmem>>, vector<248x32xf32>
    tpu.vector_store %arg6[%c249_21, %c0_22], %20 {strides = array<i32>} : memref<498x32xf32, #tpu.memory_space<vmem>>, vector<248x32xf32>,
    %c250 = arith.constant 250 : index
    %c0_23 = arith.constant 0 : index
    %22 = vector.load %arg6[%c250, %c0_23] : memref<498x32xf32, #tpu.memory_space<vmem>>, vector<248x32xf32>
    %23 = vector.extract_strided_slice %17 {offsets = [0, 32], sizes = [248, 32], strides = [1, 1]} : vector<248x64xf32> to vector<248x32xf32>
    %24 = arith.addf %22, %23 : vector<248x32xf32>
    %c250_24 = arith.constant 250 : index
    %c0_25 = arith.constant 0 : index
    %25 = vector.load %arg6[%c250_24, %c0_25] : memref<498x32xf32, #tpu.memory_space<vmem>>, vector<248x32xf32>
    tpu.vector_store %arg6[%c250_24, %c0_25], %24 {strides = array<i32>} : memref<498x32xf32, #tpu.memory_space<vmem>>, vector<248x32xf32>,
    %c0_26 = arith.constant 0 : index
    %c0_27 = arith.constant 0 : index
    %26 = vector.load %arg6[%c0_26, %c0_27] : memref<498x32xf32, #tpu.memory_space<vmem>>, vector<498x32xf32>
    %c0_28 = arith.constant 0 : index
    %c0_29 = arith.constant 0 : index
    %27 = vector.load %arg2[%c0_28, %c0_29] : memref<1x32xf32, #tpu.memory_space<vmem>>, vector<1x32xf32>
    %28 = vector.broadcast %27 : vector<1x32xf32> to vector<498x32xf32>
    %29 = arith.addf %26, %28 : vector<498x32xf32>
    %cst_30 = arith.constant dense<0.000000e+00> : vector<32xf32>
    %30 = vector.multi_reduction <add>, %29, %cst_30 [0] : vector<498x32xf32> to vector<32xf32>
    %31 = vector.shape_cast %30 : vector<32xf32> to vector<1x32xf32>
    %32 = arith.mulf %29, %29 : vector<498x32xf32>
    %cst_31 = arith.constant dense<0.000000e+00> : vector<32xf32>
    %33 = vector.multi_reduction <add>, %32, %cst_31 [0] : vector<498x32xf32> to vector<32xf32>
    %34 = vector.shape_cast %33 : vector<32xf32> to vector<1x32xf32>
    %c0_32 = arith.constant 0 : index
    %c0_33 = arith.constant 0 : index
    %35 = vector.load %arg3[%c0_32, %c0_33] : memref<32x32xf32, #tpu.memory_space<vmem>>, vector<32x32xf32>
    %cst_34 = arith.constant dense<0.000000e+00> : vector<1x32xf32>
    %36 = tpu.matmul %31, %35, %cst_34 {dimension_numbers = #tpu.dot_dimension_numbers<[1], [0], [0], [1], [0, 0, 1, 1], [], []>} : vector<1x32xf32>, vector<32x32xf32>, vector<1x32xf32> -> vector<1x32xf32>
    %cst_35 = arith.constant 2.510040e-04 : f32
    %37 = vector.broadcast %cst_35 : f32 to vector<1x32xf32>
    %38 = arith.mulf %36, %37 : vector<1x32xf32>
    %c0_36 = arith.constant 0 : index
    %c0_37 = arith.constant 0 : index
    %39 = vector.load %arg3[%c0_36, %c0_37] : memref<32x32xf32, #tpu.memory_space<vmem>>, vector<32x32xf32>
    %cst_38 = arith.constant dense<0.000000e+00> : vector<1x32xf32>
    %40 = tpu.matmul %34, %39, %cst_38 {dimension_numbers = #tpu.dot_dimension_numbers<[1], [0], [0], [1], [0, 0, 1, 1], [], []>} : vector<1x32xf32>, vector<32x32xf32>, vector<1x32xf32> -> vector<1x32xf32>
    %cst_39 = arith.constant 2.510040e-04 : f32
    %41 = vector.broadcast %cst_39 : f32 to vector<1x32xf32>
    %42 = arith.mulf %40, %41 : vector<1x32xf32>
    %43 = arith.mulf %38, %38 : vector<1x32xf32>
    %44 = arith.subf %42, %43 : vector<1x32xf32>
    %cst_40 = arith.constant 9.99999974E-6 : f32
    %45 = vector.broadcast %cst_40 : f32 to vector<1x32xf32>
    %46 = arith.addf %44, %45 : vector<1x32xf32>
    %47 = math.rsqrt %46 : vector<1x32xf32>
    %48 = vector.broadcast %38 : vector<1x32xf32> to vector<498x32xf32>
    %49 = arith.subf %29, %48 : vector<498x32xf32>
    %c0_41 = arith.constant 0 : index
    %c0_42 = arith.constant 0 : index
    %50 = vector.load %arg4[%c0_41, %c0_42] : memref<1x32xf32, #tpu.memory_space<vmem>>, vector<1x32xf32>
    %51 = arith.mulf %47, %50 : vector<1x32xf32>
    %52 = vector.broadcast %51 : vector<1x32xf32> to vector<498x32xf32>
    %53 = arith.mulf %49, %52 : vector<498x32xf32>
    %c0_43 = arith.constant 0 : index
    %c0_44 = arith.constant 0 : index
    %54 = vector.load %arg5[%c0_43, %c0_44] : memref<1x32xf32, #tpu.memory_space<vmem>>, vector<1x32xf32>
    %55 = vector.broadcast %54 : vector<1x32xf32> to vector<498x32xf32>
    %56 = arith.addf %53, %55 : vector<498x32xf32>
    %c0_45 = arith.constant 0 : index
    %c0_46 = arith.constant 0 : index
    %57 = vector.load %arg6[%c0_45, %c0_46] : memref<498x32xf32, #tpu.memory_space<vmem>>, vector<498x32xf32>
    tpu.vector_store %arg6[%c0_45, %c0_46], %56 {strides = array<i32>} : memref<498x32xf32, #tpu.memory_space<vmem>>, vector<498x32xf32>,
    return
  }
}

module attributes {stable_mosaic.version = 11 : i64} {
  func.func @_stage1_kernel(%arg0: memref<7x2xf32, #tpu.memory_space<vmem>>, %arg1: memref<15x7xf32, #tpu.memory_space<vmem>>, %arg2: memref<15x1xf32, #tpu.memory_space<vmem>>, %arg3: memref<30x15xf32, #tpu.memory_space<vmem>>, %arg4: memref<30x1xf32, #tpu.memory_space<vmem>>, %arg5: memref<1x128xf32, #tpu.memory_space<vmem>>, %arg6: memref<1x64xf32, #tpu.memory_space<vmem>>, %arg7: memref<64x64xf32, #tpu.memory_space<vmem>>, %arg8: memref<1x64xf32, #tpu.memory_space<vmem>>, %arg9: memref<1x64xf32, #tpu.memory_space<vmem>>, %arg10: memref<62x64xf32, #tpu.memory_space<vmem>>) attributes {dimension_semantics = [], scalar_prefetch = 0 : i64, scratch_operands = 0 : i64, tpu.core_type = #tpu.core_type<tc>} {
    %c0 = arith.constant 0 : index
    %c0_0 = arith.constant 0 : index
    %0 = vector.load %arg1[%c0, %c0_0] : memref<15x7xf32, #tpu.memory_space<vmem>>, vector<15x7xf32>
    %c0_1 = arith.constant 0 : index
    %c0_2 = arith.constant 0 : index
    %1 = vector.load %arg0[%c0_1, %c0_2] : memref<7x2xf32, #tpu.memory_space<vmem>>, vector<7x2xf32>
    %cst = arith.constant dense<0.000000e+00> : vector<15x2xf32>
    %2 = tpu.matmul %0, %1, %cst {dimension_numbers = #tpu.dot_dimension_numbers<[1], [0], [0], [1], [0, 0, 1, 1], [], []>} : vector<15x7xf32>, vector<7x2xf32>, vector<15x2xf32> -> vector<15x2xf32>
    %c0_3 = arith.constant 0 : index
    %c0_4 = arith.constant 0 : index
    %3 = vector.load %arg2[%c0_3, %c0_4] : memref<15x1xf32, #tpu.memory_space<vmem>>, vector<15x1xf32>
    %4 = vector.broadcast %3 : vector<15x1xf32> to vector<15x2xf32>
    %5 = arith.addf %2, %4 : vector<15x2xf32>
    %c0_5 = arith.constant 0 : index
    %c0_6 = arith.constant 0 : index
    %6 = vector.load %arg3[%c0_5, %c0_6] : memref<30x15xf32, #tpu.memory_space<vmem>>, vector<30x15xf32>
    %cst_7 = arith.constant dense<0.000000e+00> : vector<30x2xf32>
    %7 = tpu.matmul %6, %5, %cst_7 {dimension_numbers = #tpu.dot_dimension_numbers<[1], [0], [0], [1], [0, 0, 1, 1], [], []>} : vector<30x15xf32>, vector<15x2xf32>, vector<30x2xf32> -> vector<30x2xf32>
    %c0_8 = arith.constant 0 : index
    %c0_9 = arith.constant 0 : index
    %8 = vector.load %arg4[%c0_8, %c0_9] : memref<30x1xf32, #tpu.memory_space<vmem>>, vector<30x1xf32>
    %9 = vector.broadcast %8 : vector<30x1xf32> to vector<30x2xf32>
    %10 = arith.addf %7, %9 : vector<30x2xf32>
    %cst_10 = arith.constant 0.000000e+00 : f32
    %11 = vector.broadcast %cst_10 : f32 to vector<62x64xf32>
    %c0_11 = arith.constant 0 : index
    %c0_12 = arith.constant 0 : index
    %12 = vector.load %arg10[%c0_11, %c0_12] : memref<62x64xf32, #tpu.memory_space<vmem>>, vector<62x64xf32>
    tpu.vector_store %arg10[%c0_11, %c0_12], %11 {strides = array<i32>} : memref<62x64xf32, #tpu.memory_space<vmem>>, vector<62x64xf32>,
    %13 = vector.extract_strided_slice %10 {offsets = [0, 0], sizes = [30, 1], strides = [1, 1]} : vector<30x2xf32> to vector<30x1xf32>
    %c0_13 = arith.constant 0 : index
    %c0_14 = arith.constant 0 : index
    %14 = vector.load %arg5[%c0_13, %c0_14] : memref<1x128xf32, #tpu.memory_space<vmem>>, vector<1x128xf32>
    %15 = vector.broadcast %13 : vector<30x1xf32> to vector<30x128xf32>
    %16 = vector.broadcast %14 : vector<1x128xf32> to vector<30x128xf32>
    %17 = arith.mulf %15, %16 : vector<30x128xf32>
    %c0_15 = arith.constant 0 : index
    %c0_16 = arith.constant 0 : index
    %18 = vector.load %arg10[%c0_15, %c0_16] : memref<62x64xf32, #tpu.memory_space<vmem>>, vector<30x64xf32>
    %19 = vector.extract_strided_slice %17 {offsets = [0, 0], sizes = [30, 64], strides = [1, 1]} : vector<30x128xf32> to vector<30x64xf32>
    %20 = arith.addf %18, %19 : vector<30x64xf32>
    %c0_17 = arith.constant 0 : index
    %c0_18 = arith.constant 0 : index
    %21 = vector.load %arg10[%c0_17, %c0_18] : memref<62x64xf32, #tpu.memory_space<vmem>>, vector<30x64xf32>
    tpu.vector_store %arg10[%c0_17, %c0_18], %20 {strides = array<i32>} : memref<62x64xf32, #tpu.memory_space<vmem>>, vector<30x64xf32>,
    %c1 = arith.constant 1 : index
    %c0_19 = arith.constant 0 : index
    %22 = vector.load %arg10[%c1, %c0_19] : memref<62x64xf32, #tpu.memory_space<vmem>>, vector<30x64xf32>
    %23 = vector.extract_strided_slice %17 {offsets = [0, 64], sizes = [30, 64], strides = [1, 1]} : vector<30x128xf32> to vector<30x64xf32>
    %24 = arith.addf %22, %23 : vector<30x64xf32>
    %c1_20 = arith.constant 1 : index
    %c0_21 = arith.constant 0 : index
    %25 = vector.load %arg10[%c1_20, %c0_21] : memref<62x64xf32, #tpu.memory_space<vmem>>, vector<30x64xf32>
    tpu.vector_store %arg10[%c1_20, %c0_21], %24 {strides = array<i32>} : memref<62x64xf32, #tpu.memory_space<vmem>>, vector<30x64xf32>,
    %26 = vector.extract_strided_slice %10 {offsets = [0, 1], sizes = [30, 1], strides = [1, 1]} : vector<30x2xf32> to vector<30x1xf32>
    %c0_22 = arith.constant 0 : index
    %c0_23 = arith.constant 0 : index
    %27 = vector.load %arg5[%c0_22, %c0_23] : memref<1x128xf32, #tpu.memory_space<vmem>>, vector<1x128xf32>
    %28 = vector.broadcast %26 : vector<30x1xf32> to vector<30x128xf32>
    %29 = vector.broadcast %27 : vector<1x128xf32> to vector<30x128xf32>
    %30 = arith.mulf %28, %29 : vector<30x128xf32>
    %c31 = arith.constant 31 : index
    %c0_24 = arith.constant 0 : index
    %31 = vector.load %arg10[%c31, %c0_24] : memref<62x64xf32, #tpu.memory_space<vmem>>, vector<30x64xf32>
    %32 = vector.extract_strided_slice %30 {offsets = [0, 0], sizes = [30, 64], strides = [1, 1]} : vector<30x128xf32> to vector<30x64xf32>
    %33 = arith.addf %31, %32 : vector<30x64xf32>
    %c31_25 = arith.constant 31 : index
    %c0_26 = arith.constant 0 : index
    %34 = vector.load %arg10[%c31_25, %c0_26] : memref<62x64xf32, #tpu.memory_space<vmem>>, vector<30x64xf32>
    tpu.vector_store %arg10[%c31_25, %c0_26], %33 {strides = array<i32>} : memref<62x64xf32, #tpu.memory_space<vmem>>, vector<30x64xf32>,
    %c32 = arith.constant 32 : index
    %c0_27 = arith.constant 0 : index
    %35 = vector.load %arg10[%c32, %c0_27] : memref<62x64xf32, #tpu.memory_space<vmem>>, vector<30x64xf32>
    %36 = vector.extract_strided_slice %30 {offsets = [0, 64], sizes = [30, 64], strides = [1, 1]} : vector<30x128xf32> to vector<30x64xf32>
    %37 = arith.addf %35, %36 : vector<30x64xf32>
    %c32_28 = arith.constant 32 : index
    %c0_29 = arith.constant 0 : index
    %38 = vector.load %arg10[%c32_28, %c0_29] : memref<62x64xf32, #tpu.memory_space<vmem>>, vector<30x64xf32>
    tpu.vector_store %arg10[%c32_28, %c0_29], %37 {strides = array<i32>} : memref<62x64xf32, #tpu.memory_space<vmem>>, vector<30x64xf32>,
    %c0_30 = arith.constant 0 : index
    %c0_31 = arith.constant 0 : index
    %39 = vector.load %arg10[%c0_30, %c0_31] : memref<62x64xf32, #tpu.memory_space<vmem>>, vector<62x64xf32>
    %c0_32 = arith.constant 0 : index
    %c0_33 = arith.constant 0 : index
    %40 = vector.load %arg6[%c0_32, %c0_33] : memref<1x64xf32, #tpu.memory_space<vmem>>, vector<1x64xf32>
    %41 = vector.broadcast %40 : vector<1x64xf32> to vector<62x64xf32>
    %42 = arith.addf %39, %41 : vector<62x64xf32>
    %cst_34 = arith.constant dense<0.000000e+00> : vector<64xf32>
    %43 = vector.multi_reduction <add>, %42, %cst_34 [0] : vector<62x64xf32> to vector<64xf32>
    %44 = vector.shape_cast %43 : vector<64xf32> to vector<1x64xf32>
    %45 = arith.mulf %42, %42 : vector<62x64xf32>
    %cst_35 = arith.constant dense<0.000000e+00> : vector<64xf32>
    %46 = vector.multi_reduction <add>, %45, %cst_35 [0] : vector<62x64xf32> to vector<64xf32>
    %47 = vector.shape_cast %46 : vector<64xf32> to vector<1x64xf32>
    %c0_36 = arith.constant 0 : index
    %c0_37 = arith.constant 0 : index
    %48 = vector.load %arg7[%c0_36, %c0_37] : memref<64x64xf32, #tpu.memory_space<vmem>>, vector<64x64xf32>
    %cst_38 = arith.constant dense<0.000000e+00> : vector<1x64xf32>
    %49 = tpu.matmul %44, %48, %cst_38 {dimension_numbers = #tpu.dot_dimension_numbers<[1], [0], [0], [1], [0, 0, 1, 1], [], []>} : vector<1x64xf32>, vector<64x64xf32>, vector<1x64xf32> -> vector<1x64xf32>
    %cst_39 = arith.constant 0.00201612897 : f32
    %50 = vector.broadcast %cst_39 : f32 to vector<1x64xf32>
    %51 = arith.mulf %49, %50 : vector<1x64xf32>
    %c0_40 = arith.constant 0 : index
    %c0_41 = arith.constant 0 : index
    %52 = vector.load %arg7[%c0_40, %c0_41] : memref<64x64xf32, #tpu.memory_space<vmem>>, vector<64x64xf32>
    %cst_42 = arith.constant dense<0.000000e+00> : vector<1x64xf32>
    %53 = tpu.matmul %47, %52, %cst_42 {dimension_numbers = #tpu.dot_dimension_numbers<[1], [0], [0], [1], [0, 0, 1, 1], [], []>} : vector<1x64xf32>, vector<64x64xf32>, vector<1x64xf32> -> vector<1x64xf32>
    %cst_43 = arith.constant 0.00201612897 : f32
    %54 = vector.broadcast %cst_43 : f32 to vector<1x64xf32>
    %55 = arith.mulf %53, %54 : vector<1x64xf32>
    %56 = arith.mulf %51, %51 : vector<1x64xf32>
    %57 = arith.subf %55, %56 : vector<1x64xf32>
    %cst_44 = arith.constant 9.99999974E-6 : f32
    %58 = vector.broadcast %cst_44 : f32 to vector<1x64xf32>
    %59 = arith.addf %57, %58 : vector<1x64xf32>
    %60 = math.rsqrt %59 : vector<1x64xf32>
    %61 = vector.broadcast %51 : vector<1x64xf32> to vector<62x64xf32>
    %62 = arith.subf %42, %61 : vector<62x64xf32>
    %c0_45 = arith.constant 0 : index
    %c0_46 = arith.constant 0 : index
    %63 = vector.load %arg8[%c0_45, %c0_46] : memref<1x64xf32, #tpu.memory_space<vmem>>, vector<1x64xf32>
    %64 = arith.mulf %60, %63 : vector<1x64xf32>
    %65 = vector.broadcast %64 : vector<1x64xf32> to vector<62x64xf32>
    %66 = arith.mulf %62, %65 : vector<62x64xf32>
    %c0_47 = arith.constant 0 : index
    %c0_48 = arith.constant 0 : index
    %67 = vector.load %arg9[%c0_47, %c0_48] : memref<1x64xf32, #tpu.memory_space<vmem>>, vector<1x64xf32>
    %68 = vector.broadcast %67 : vector<1x64xf32> to vector<62x64xf32>
    %69 = arith.addf %66, %68 : vector<62x64xf32>
    %c0_49 = arith.constant 0 : index
    %c0_50 = arith.constant 0 : index
    %70 = vector.load %arg10[%c0_49, %c0_50] : memref<62x64xf32, #tpu.memory_space<vmem>>, vector<62x64xf32>
    tpu.vector_store %arg10[%c0_49, %c0_50], %69 {strides = array<i32>} : memref<62x64xf32, #tpu.memory_space<vmem>>, vector<62x64xf32>,
    return
  }
}

</mosaic_0001>

<llo_original>
// kernel: decoder_forward.2
$region0: #{decoder_forward.2}
  #allocation0 [shape = 'u32[]', space=smem, size = 0x4, offset = 0x4, fixed_abs, tag = 'smem constant byte address 0x4 - core index']
  #allocation1 [shape = 'u32[72,128]{1,0:T(1,128)}', space=vmem, size = 0x9000, scoped, tag = 'internal scratch']
  %s0 = inlined_call_operand.vmem [shape: f32[7,2], index: 0, kind: input, shape index: {}]
  %s1 = inlined_call_operand.vmem [shape: f32[15,7], index: 1, kind: input, shape index: {}]
  %s2 = inlined_call_operand.vmem [shape: f32[15,1], index: 2, kind: input, shape index: {}]
  %s3 = inlined_call_operand.vmem [shape: f32[30,15], index: 3, kind: input, shape index: {}]
  %s4 = inlined_call_operand.vmem [shape: f32[30,1], index: 4, kind: input, shape index: {}]
  %s5 = inlined_call_operand.hbm [shape: f32[1,128], index: 5, kind: input, shape index: {}]
  %s6 = inlined_call_operand.hbm [shape: f32[1,64], index: 6, kind: input, shape index: {}]
  %s7 = inlined_call_operand.hbm [shape: f32[64,64], index: 7, kind: input, shape index: {}]
  %s8 = inlined_call_operand.hbm [shape: f32[1,64], index: 8, kind: input, shape index: {}]
  %s9 = inlined_call_operand.hbm [shape: f32[1,64], index: 9, kind: input, shape index: {}]
  %s10 = inlined_call_operand.vmem [shape: f32[62,64], index: 10, kind: output, shape index: {}]
  %s11 = sld [smem:[#allocation0]]
  $region70: #{decoder_forward.2} parent=0
    _
  %s13 = ssub.s32 1, %s11
  %s14 = scalar_select 0, %s13, %s11
  $region1: #{decoder_forward.2} parent=0
    #allocation2 [shape = 'u8[512]{0}', space=vmem, size = 0x400, scoped, tag = 'input window, operand 5, single buffered']
    #allocation3 [shape = 's32[1]{0}', space=sflag, size = 0x4, scoped, tag = 'scoped memory for decoder_forward.2']
    #allocation4 [shape = 'u8[512]{0}', space=vmem, size = 0x400, scoped, tag = 'input window, operand 6, single buffered']
    #allocation5 [shape = 's32[1]{0}', space=sflag, size = 0x4, scoped, tag = 'scoped memory for decoder_forward.2']
    #allocation6 [shape = 'u8[32768]{0}', space=vmem, size = 0x8000, scoped, tag = 'input window, operand 7, single buffered']
    #allocation7 [shape = 'u8[512]{0}', space=vmem, size = 0x400, scoped, tag = 'input window, operand 8, single buffered']
    #allocation8 [shape = 's32[1]{0}', space=sflag, size = 0x4, scoped, tag = 'scoped memory for decoder_forward.2']
    #allocation9 [shape = 'u8[512]{0}', space=vmem, size = 0x400, scoped, tag = 'input window, operand 9, single buffered']
    %15 = vsyncpa [#allocation3], 0
    %16 = vsyncpa [#allocation5], 0
    %17 = vsyncpa [#allocation8], 0
    // Predicated region
    $region2: #{decoder_forward.2} parent=1 // pred_check
      _
    $region3: #{decoder_forward.2} parent=1 // pred_check_branch
      %19 = sbr.rel (0) target = $region5
    $region4: #{decoder_forward.2} parent=1 // pred_region
      _
    $region5: #{decoder_forward.2} parent=1 // pred_fallthru
      _
    // Predicated region
    $region6: #{decoder_forward.2} parent=1 // pred_check
      _
    $region7: #{decoder_forward.2} parent=1 // pred_check_branch
      %21 = sbr.rel (0) target = $region9
    $region8: #{decoder_forward.2} parent=1 // pred_region
      _
    $region9: #{decoder_forward.2} parent=1 // pred_fallthru
      _
    // Predicated region
    $region10: #{decoder_forward.2} parent=1 // pred_check
      _
    $region11: #{decoder_forward.2} parent=1 // pred_check_branch
      %23 = sbr.rel (0) target = $region13
    $region12: #{decoder_forward.2} parent=1 // pred_region
      _
    $region13: #{decoder_forward.2} parent=1 // pred_fallthru
      _
    // Predicated region
    $region14: #{decoder_forward.2} parent=1 // pred_check
      _
    $region15: #{decoder_forward.2} parent=1 // pred_check_branch
      %25 = sbr.rel (0) target = $region17
    $region16: #{decoder_forward.2} parent=1 // pred_region
      _
    $region17: #{decoder_forward.2} parent=1 // pred_fallthru
      _
    // Predicated region
    $region18: #{decoder_forward.2} parent=1 // pred_check
      _
    $region19: #{decoder_forward.2} parent=1 // pred_check_branch
      %27 = sbr.rel (0) target = $region21
    $region20: #{decoder_forward.2} parent=1 // pred_region
      _
    $region21: #{decoder_forward.2} parent=1 // pred_fallthru
      _
    // Predicated region
    $region22: #{decoder_forward.2} parent=1 // pred_check
      _
    $region23: #{decoder_forward.2} parent=1 // pred_check_branch
      %29 = sbr.rel (0) target = $region25
    $region24: #{decoder_forward.2} parent=1 // pred_region
      %31 = vsyncadd [#allocation3], 0
      %s33 = sshll.u32 %s5, 4
      %s34 = int_to_ptr.hbm [resolvable:$true] %s33
      %s35 = sshll.u32 [#allocation2], 4
      %s36 = int_to_ptr.vmem [resolvable:$true] %s35
      %38 = dma.hbm_to_vmem [thread:$0]  %s34, 16, %s36, [#allocation3]
    $region25: #{decoder_forward.2} parent=1 // pred_fallthru
      _
    // Predicated region
    $region26: #{decoder_forward.2} parent=1 // pred_check
      _
    $region27: #{decoder_forward.2} parent=1 // pred_check_branch
      %40 = sbr.rel (0) target = $region29
    $region28: #{decoder_forward.2} parent=1 // pred_region
      %42 = vsyncadd [#allocation5], 0
      %s44 = sshll.u32 %s6, 4
      %s45 = int_to_ptr.hbm [resolvable:$true] %s44
      %s46 = sshll.u32 [#allocation4], 4
      %s47 = int_to_ptr.vmem [resolvable:$true] %s46
      %49 = dma.hbm_to_vmem [thread:$0]  %s45, 16, %s47, [#allocation5]
    $region29: #{decoder_forward.2} parent=1 // pred_fallthru
      _
    // Predicated region
    $region30: #{decoder_forward.2} parent=1 // pred_check
      _
    $region31: #{decoder_forward.2} parent=1 // pred_check_branch
      %51 = sbr.rel (0) target = $region33
    $region32: #{decoder_forward.2} parent=1 // pred_region
      %53 = vsyncadd [#allocation5], 0
      %s54 = sshll.u32 %s7, 4
      %s55 = int_to_ptr.hbm [resolvable:$true] %s54
      %s56 = sshll.u32 [#allocation6], 4
      %s57 = int_to_ptr.vmem [resolvable:$true] %s56
      %62 = dma.hbm_to_vmem [thread:$0]  %s55, 1024, %s57, [#allocation5], 128, 128, 8
    $region33: #{decoder_forward.2} parent=1 // pred_fallthru
      _
    // Predicated region
    $region34: #{decoder_forward.2} parent=1 // pred_check
      _
    $region35: #{decoder_forward.2} parent=1 // pred_check_branch
      %64 = sbr.rel (0) target = $region37
    $region36: #{decoder_forward.2} parent=1 // pred_region
      %66 = vsyncadd [#allocation8], 0
      %s68 = sshll.u32 %s8, 4
      %s69 = int_to_ptr.hbm [resolvable:$true] %s68
      %s70 = sshll.u32 [#allocation7], 4
      %s71 = int_to_ptr.vmem [resolvable:$true] %s70
      %73 = dma.hbm_to_vmem [thread:$0]  %s69, 16, %s71, [#allocation8]
    $region37: #{decoder_forward.2} parent=1 // pred_fallthru
      _
    // Predicated region
    $region38: #{decoder_forward.2} parent=1 // pred_check
      _
    $region39: #{decoder_forward.2} parent=1 // pred_check_branch
      %75 = sbr.rel (0) target = $region41
    $region40: #{decoder_forward.2} parent=1 // pred_region
      %77 = vsyncadd [#allocation8], 0
      %s79 = sshll.u32 %s9, 4
      %s80 = int_to_ptr.hbm [resolvable:$true] %s79
      %s81 = sshll.u32 [#allocation9], 4
      %s82 = int_to_ptr.vmem [resolvable:$true] %s81
      %84 = dma.hbm_to_vmem [thread:$0]  %s80, 16, %s82, [#allocation8]
    $region41: #{decoder_forward.2} parent=1 // pred_fallthru
      _
    // Predicated region
    $region42: #{decoder_forward.2} parent=1 // pred_check
      _
    $region43: #{decoder_forward.2} parent=1 // pred_check_branch
      %86 = sbr.rel (0) target = $region45
    $region44: #{decoder_forward.2} parent=1 // pred_region
      %88 = dma.done [#allocation3], 16
    $region45: #{decoder_forward.2} parent=1 // pred_fallthru
      _
    // Predicated region
    $region46: #{decoder_forward.2} parent=1 // pred_check
      _
    $region47: #{decoder_forward.2} parent=1 // pred_check_branch
      %90 = sbr.rel (0) target = $region49
    $region48: #{decoder_forward.2} parent=1 // pred_region
      %92 = dma.done [#allocation5], 16
    $region49: #{decoder_forward.2} parent=1 // pred_fallthru
      _
    // Predicated region
    $region50: #{decoder_forward.2} parent=1 // pred_check
      _
    $region51: #{decoder_forward.2} parent=1 // pred_check_branch
      %94 = sbr.rel (0) target = $region53
    $region52: #{decoder_forward.2} parent=1 // pred_region
      %96 = dma.done [#allocation5], 1024
    $region53: #{decoder_forward.2} parent=1 // pred_fallthru
      _
    // Predicated region
    $region54: #{decoder_forward.2} parent=1 // pred_check
      _
    $region55: #{decoder_forward.2} parent=1 // pred_check_branch
      %98 = sbr.rel (0) target = $region57
    $region56: #{decoder_forward.2} parent=1 // pred_region
      %100 = dma.done [#allocation8], 16
    $region57: #{decoder_forward.2} parent=1 // pred_fallthru
      _
    // Predicated region
    $region58: #{decoder_forward.2} parent=1 // pred_check
      _
    $region59: #{decoder_forward.2} parent=1 // pred_check_branch
      %102 = sbr.rel (0) target = $region61
    $region60: #{decoder_forward.2} parent=1 // pred_region
      %104 = dma.done [#allocation8], 16
    $region61: #{decoder_forward.2} parent=1 // pred_fallthru
      _
    %v105 = vld [vmem:[%s1] sm:$0xff]
    %v106 = vld [vmem:[%s1 + $0x8] sm:$0x7f]
    %v107 = vld [vmem:[%s0] sm:$0x7f]
    %v108 = vld [vmem:[%s2] sm:$0xff]
    %v109 = vld [vmem:[%s2 + $0x8] sm:$0x7f]
    %111 = vset.pattern.permute.xlu0 0
    %112 = vperm.xlu0 %111, %v108
    %v113 = vpop.permute.xlu0 %112
    %116 = vset.pattern.permute.xlu0 0
    %117 = vperm.xlu0 %116, %v109
    %v118 = vpop.permute.xlu0 %117
    %vm120 = vcmask 56320
    %v122 = vsel %vm120, %v105, 0
    %v125 = vsel %vm120, %v106, 0
    %vm127 = vcmask 1046528
    %v129 = vsel %vm127, %v107, 0
    %131 = vmatpush.msra.mxu0 0.0
    %132 = vmatpush.msra.mxu0 0.0
    %133 = vmatpush.msra.mxu0 0.0
    %134 = vmatpush.msra.mxu0 0.0
    %135 = vmatpush.msra.mxu0 0.0
    %136 = vmatpush.msra.mxu0 0.0
    %137 = vmatpush.msra.mxu0 0.0
    %138 = vmatpush.msra.mxu0 0.0
    %139 = vmatpush.msra.mxu0 0.0
    %140 = vmatpush.msra.mxu0 0.0
    %141 = vmatpush.msra.mxu0 0.0
    %142 = vmatpush.msra.mxu0 0.0
    %143 = vmatpush.msra.mxu0 0.0
    %144 = vmatpush.msra.mxu0 0.0
    %145 = vmatpush.msra.mxu0 0.0
    %146 = vmatpush.msra.mxu0 %v129
    %147 = vmatmul.f32.gmra.mxu0 %v122
    %v148 = vpop.f32.mrf.mxu0
    %v149 = vadd.f32 %v113, %v148
    %150 = vmatmul.f32.gmra.mxu0 %v125
    %v151 = vpop.f32.mrf.mxu0
    %v152 = vadd.f32 %v118, %v151
    %153 = vdwg.mxu0
    %v154 = vld [vmem:[%s3] sm:$0xff]
    %v155 = vld [vmem:[%s3 + $0x8] sm:$0xff]
    %v156 = vld [vmem:[%s3 + $0x10] sm:$0xff]
    %v157 = vld [vmem:[%s3 + $0x18] sm:$0x3f]
    %v158 = vld [vmem:[%s4] sm:$0xff]
    %v159 = vld [vmem:[%s4 + $0x8] sm:$0xff]
    %v160 = vld [vmem:[%s4 + $0x10] sm:$0xff]
    %v161 = vld [vmem:[%s4 + $0x18] sm:$0x3f]
    %163 = vset.pattern.permute.xlu0 0
    %164 = vperm.xlu0 %163, %v158
    %v165 = vpop.permute.xlu0 %164
    %168 = vset.pattern.permute.xlu0 0
    %169 = vperm.xlu0 %168, %v159
    %v170 = vpop.permute.xlu0 %169
    %173 = vset.pattern.permute.xlu0 0
    %174 = vperm.xlu0 %173, %v160
    %v175 = vpop.permute.xlu0 %174
    %178 = vset.pattern.permute.xlu0 0
    %179 = vperm.xlu0 %178, %v161
    %v180 = vpop.permute.xlu0 %179
    %vm182 = vcmask 121856
    %v184 = vsel %vm182, %v154, 0
    %v187 = vsel %vm182, %v155, 0
    %v190 = vsel %vm182, %v156, 0
    %v193 = vsel %vm182, %v157, 0
    %v196 = vsel %vm127, %v152, 0
    %198 = vmatpush.msra.mxu0 0.0
    %199 = vmatpush.msra.mxu0 0.0
    %200 = vmatpush.msra.mxu0 0.0
    %201 = vmatpush.msra.mxu0 0.0
    %202 = vmatpush.msra.mxu0 0.0
    %203 = vmatpush.msra.mxu0 0.0
    %204 = vmatpush.msra.mxu0 0.0
    %205 = vmatpush.msra.mxu0 0.0
    %206 = vmatpush.msra.mxu0 0.0
    %207 = vmatpush.msra.mxu0 0.0
    %208 = vmatpush.msra.mxu0 0.0
    %209 = vmatpush.msra.mxu0 0.0
    %210 = vmatpush.msra.mxu0 0.0
    %211 = vmatpush.msra.mxu0 0.0
    %212 = vmatpush.msra.mxu0 %v196
    %213 = vmatpush.msra.mxu0 %v149
    %214 = vmatmul.f32.gmra.mxu0 %v184
    %v215 = vpop.f32.mrf.mxu0
    %v216 = vadd.f32 %v165, %v215
    %217 = vmatmul.f32.gmra.mxu0 %v187
    %v218 = vpop.f32.mrf.mxu0
    %v219 = vadd.f32 %v170, %v218
    %220 = vmatmul.f32.gmra.mxu0 %v190
    %v221 = vpop.f32.mrf.mxu0
    %v222 = vadd.f32 %v175, %v221
    %223 = vmatmul.f32.gmra.mxu0 %v193
    %v224 = vpop.f32.mrf.mxu0
    %v225 = vadd.f32 %v180, %v224
    %226 = vdwg.mxu0
    %vm227 = vcmask 523264
    %228 = vst.msk [vmem:[%s10] sm:$0xff] %vm227, 0.0
    %229 = vst.msk [vmem:[%s10 + $0x8] sm:$0xff] %vm227, 0.0
    %230 = vst.msk [vmem:[%s10 + $0x10] sm:$0xff] %vm227, 0.0
    %231 = vst.msk [vmem:[%s10 + $0x18] sm:$0xff] %vm227, 0.0
    %232 = vst.msk [vmem:[%s10 + $0x20] sm:$0xff] %vm227, 0.0
    %233 = vst.msk [vmem:[%s10 + $0x28] sm:$0xff] %vm227, 0.0
    %234 = vst.msk [vmem:[%s10 + $0x30] sm:$0xff] %vm227, 0.0
    %vm235 = vcmask 521216
    %236 = vst.msk [vmem:[%s10 + $0x38] sm:$0x3f] %vm235, 0.0
    %v237 = vld [vmem:[#allocation2] sm:$0x1]
    %239 = vset.pattern.permute.xlu0 0
    %240 = vperm.xlu0 %239, %v216
    %v241 = vpop.permute.xlu0 %240
    %244 = vset.pattern.permute.xlu0 0
    %245 = vperm.xlu0 %244, %v219
    %v246 = vpop.permute.xlu0 %245
    %249 = vset.pattern.permute.xlu0 0
    %250 = vperm.xlu0 %249, %v222
    %v251 = vpop.permute.xlu0 %250
    %254 = vset.pattern.permute.xlu0 0
    %255 = vperm.xlu0 %254, %v225
    %v256 = vpop.permute.xlu0 %255
    %v259 = vperm.slane %v237, 0
    %v261 = vmul.f32 %v241, %v259
    %v262 = vmul.f32 %v246, %v259
    %v263 = vmul.f32 %v251, %v259
    %v264 = vmul.f32 %v256, %v259
    %v265 = vld [vmem:[%s10] sm:$0xff]
    %v266 = vld [vmem:[%s10 + $0x8] sm:$0xff]
    %v267 = vld [vmem:[%s10 + $0x10] sm:$0xff]
    %v268 = vld [vmem:[%s10 + $0x18] sm:$0x3f]
    %v269 = vadd.f32 %v265, %v261
    %v270 = vadd.f32 %v266, %v262
    %v271 = vadd.f32 %v267, %v263
    %v272 = vadd.f32 %v268, %v264
    %273 = vst.msk [vmem:[%s10] sm:$0xff] %vm227, %v269
    %274 = vst.msk [vmem:[%s10 + $0x8] sm:$0xff] %vm227, %v270
    %275 = vst.msk [vmem:[%s10 + $0x10] sm:$0xff] %vm227, %v271
    %276 = vst.msk [vmem:[%s10 + $0x18] sm:$0x3f] %vm235, %v272
    %v277 = vld [vmem:[%s10 + $0x1] sm:$0xff]
    %v278 = vld [vmem:[%s10 + $0x9] sm:$0xff]
    %v279 = vld [vmem:[%s10 + $0x11] sm:$0xff]
    %v280 = vld [vmem:[%s10 + $0x19] sm:$0x3f]
    %285 = vrot.lane.b32.xlu0 %v261, 64
    %v286 = vpop.permute.xlu0 %285
    %287 = vrot.lane.b32.xlu0 %v262, 64
    %v288 = vpop.permute.xlu0 %287
    %289 = vrot.lane.b32.xlu0 %v263, 64
    %v290 = vpop.permute.xlu0 %289
    %291 = vrot.lane.b32.xlu0 %v264, 64
    %v292 = vpop.permute.xlu0 %291
    %v297 = vadd.f32 %v277, %v286
    %v298 = vadd.f32 %v278, %v288
    %v299 = vadd.f32 %v279, %v290
    %v300 = vadd.f32 %v280, %v292
    %301 = vst.msk [vmem:[%s10 + $0x1] sm:$0xff] %vm227, %v297
    %302 = vst.msk [vmem:[%s10 + $0x9] sm:$0xff] %vm227, %v298
    %303 = vst.msk [vmem:[%s10 + $0x11] sm:$0xff] %vm227, %v299
    %304 = vst.msk [vmem:[%s10 + $0x19] sm:$0x3f] %vm235, %v300
    %v305 = vld [vmem:[#allocation2] sm:$0x1]
    %306 = vset.pattern.permute.xlu0 1
    %307 = vperm.xlu0 %306, %v216
    %v308 = vpop.permute.xlu0 %307
    %310 = vset.pattern.permute.xlu0 1
    %311 = vperm.xlu0 %310, %v219
    %v312 = vpop.permute.xlu0 %311
    %314 = vset.pattern.permute.xlu0 1
    %315 = vperm.xlu0 %314, %v222
    %v316 = vpop.permute.xlu0 %315
    %318 = vset.pattern.permute.xlu0 1
    %319 = vperm.xlu0 %318, %v225
    %v320 = vpop.permute.xlu0 %319
    %v323 = vperm.slane %v305, 0
    %v325 = vmul.f32 %v308, %v323
    %v326 = vmul.f32 %v312, %v323
    %v327 = vmul.f32 %v316, %v323
    %v328 = vmul.f32 %v320, %v323
    %v329 = vld [vmem:[%s10 + $0x1f] sm:$0xff]
    %v330 = vld [vmem:[%s10 + $0x27] sm:$0xff]
    %v331 = vld [vmem:[%s10 + $0x2f] sm:$0xff]
    %v332 = vld [vmem:[%s10 + $0x37] sm:$0x3f]
    %v333 = vadd.f32 %v329, %v325
    %v334 = vadd.f32 %v330, %v326
    %v335 = vadd.f32 %v331, %v327
    %v336 = vadd.f32 %v332, %v328
    %337 = vst.msk [vmem:[%s10 + $0x1f] sm:$0xff] %vm227, %v333
    %338 = vst.msk [vmem:[%s10 + $0x27] sm:$0xff] %vm227, %v334
    %339 = vst.msk [vmem:[%s10 + $0x2f] sm:$0xff] %vm227, %v335
    %340 = vst.msk [vmem:[%s10 + $0x37] sm:$0x3f] %vm235, %v336
    %v341 = vld [vmem:[%s10 + $0x20] sm:$0xff]
    %v342 = vld [vmem:[%s10 + $0x28] sm:$0xff]
    %v343 = vld [vmem:[%s10 + $0x30] sm:$0xff]
    %v344 = vld [vmem:[%s10 + $0x38] sm:$0x3f]
    %349 = vrot.lane.b32.xlu0 %v325, 64
    %v350 = vpop.permute.xlu0 %349
    %351 = vrot.lane.b32.xlu0 %v326, 64
    %v352 = vpop.permute.xlu0 %351
    %353 = vrot.lane.b32.xlu0 %v327, 64
    %v354 = vpop.permute.xlu0 %353
    %355 = vrot.lane.b32.xlu0 %v328, 64
    %v356 = vpop.permute.xlu0 %355
    %v361 = vadd.f32 %v341, %v350
    %v362 = vadd.f32 %v342, %v352
    %v363 = vadd.f32 %v343, %v354
    %v364 = vadd.f32 %v344, %v356
    %365 = vst.msk [vmem:[%s10 + $0x20] sm:$0xff] %vm227, %v361
    %366 = vst.msk [vmem:[%s10 + $0x28] sm:$0xff] %vm227, %v362
    %367 = vst.msk [vmem:[%s10 + $0x30] sm:$0xff] %vm227, %v363
    %368 = vst.msk [vmem:[%s10 + $0x38] sm:$0x3f] %vm235, %v364
    %v369 = vld [vmem:[%s10] sm:$0xff]
    %v370 = vld [vmem:[%s10 + $0x8] sm:$0xff]
    %v371 = vld [vmem:[%s10 + $0x10] sm:$0xff]
    %v372 = vld [vmem:[%s10 + $0x18] sm:$0xff]
    %v373 = vld [vmem:[%s10 + $0x20] sm:$0xff]
    %v374 = vld [vmem:[%s10 + $0x28] sm:$0xff]
    %v375 = vld [vmem:[%s10 + $0x30] sm:$0xff]
    %v376 = vld [vmem:[%s10 + $0x38] sm:$0x3f]
    %v377 = vld [vmem:[#allocation4] sm:$0x1]
    %v379 = vperm.slane %v377, 0
    %v381 = vadd.f32 %v369, %v379
    %v382 = vadd.f32 %v370, %v379
    %v383 = vadd.f32 %v371, %v379
    %v384 = vadd.f32 %v372, %v379
    %v385 = vadd.f32 %v373, %v379
    %v386 = vadd.f32 %v374, %v379
    %v387 = vadd.f32 %v375, %v379
    %v388 = vadd.f32 %v376, %v379
    %v389 = vsel %vm227, %v381, 0.0
    %v390 = vsel %vm227, %v382, 0.0
    %v391 = vadd.f32 %v389, %v390
    %v392 = vsel %vm227, %v383, 0.0
    %v393 = vadd.f32 %v391, %v392
    %v394 = vsel %vm227, %v384, 0.0
    %v395 = vadd.f32 %v393, %v394
    %v396 = vsel %vm227, %v385, 0.0
    %v397 = vadd.f32 %v395, %v396
    %v398 = vsel %vm227, %v386, 0.0
    %v399 = vadd.f32 %v397, %v398
    %v400 = vsel %vm227, %v387, 0.0
    %v401 = vadd.f32 %v399, %v400
    %v402 = vsel %vm235, %v388, 0.0
    %v403 = vadd.f32 %v401, %v402
    %v404 = vrot.slane %v403, 4
    %v405 = vadd.f32 %v403, %v404
    %v406 = vrot.slane %v405, 2
    %v407 = vadd.f32 %v405, %v406
    %v408 = vrot.slane %v407, 1
    %v409 = vadd.f32 %v407, %v408
    %v410 = vmul.f32 %v381, %v381
    %v411 = vmul.f32 %v382, %v382
    %v412 = vmul.f32 %v383, %v383
    %v413 = vmul.f32 %v384, %v384
    %v414 = vmul.f32 %v385, %v385
    %v415 = vmul.f32 %v386, %v386
    %v416 = vmul.f32 %v387, %v387
    %v417 = vmul.f32 %v388, %v388
    %v418 = vsel %vm227, %v410, 0.0
    %v419 = vsel %vm227, %v411, 0.0
    %v420 = vadd.f32 %v418, %v419
    %v421 = vsel %vm227, %v412, 0.0
    %v422 = vadd.f32 %v420, %v421
    %v423 = vsel %vm227, %v413, 0.0
    %v424 = vadd.f32 %v422, %v423
    %v425 = vsel %vm227, %v414, 0.0
    %v426 = vadd.f32 %v424, %v425
    %v427 = vsel %vm227, %v415, 0.0
    %v428 = vadd.f32 %v426, %v427
    %v429 = vsel %vm227, %v416, 0.0
    %v430 = vadd.f32 %v428, %v429
    %v431 = vsel %vm235, %v417, 0.0
    %v432 = vadd.f32 %v430, %v431
    %v433 = vrot.slane %v432, 4
    %v434 = vadd.f32 %v432, %v433
    %v435 = vrot.slane %v434, 2
    %v436 = vadd.f32 %v434, %v435
    %v437 = vrot.slane %v436, 1
    %v438 = vadd.f32 %v436, %v437
    %v439 = vld [vmem:[#allocation6] sm:$0xff]
    %v440 = vld [vmem:[#allocation6 + $0x8] sm:$0xff]
    %v441 = vld [vmem:[#allocation6 + $0x10] sm:$0xff]
    %v442 = vld [vmem:[#allocation6 + $0x18] sm:$0xff]
    %v443 = vld [vmem:[#allocation6 + $0x20] sm:$0xff]
    %v444 = vld [vmem:[#allocation6 + $0x28] sm:$0xff]
    %v445 = vld [vmem:[#allocation6 + $0x30] sm:$0xff]
    %v446 = vld [vmem:[#allocation6 + $0x38] sm:$0xff]
    %v448 = vsel %vm227, %v409, 0
    %450 = vmatpush.msra.mxu0 0.0
    %451 = vmatpush.msra.mxu0 0.0
    %452 = vmatpush.msra.mxu0 0.0
    %453 = vmatpush.msra.mxu0 0.0
    %454 = vmatpush.msra.mxu0 0.0
    %455 = vmatpush.msra.mxu0 0.0
    %456 = vmatpush.msra.mxu0 0.0
    %457 = vmatpush.msra.mxu0 0.0
    %458 = vmatpush.msra.mxu0 %v446
    %459 = vmatpush.msra.mxu0 %v445
    %460 = vmatpush.msra.mxu0 %v444
    %461 = vmatpush.msra.mxu0 %v443
    %462 = vmatpush.msra.mxu0 %v442
    %463 = vmatpush.msra.mxu0 %v441
    %464 = vmatpush.msra.mxu0 %v440
    %465 = vmatpush.msra.mxu0 %v439
    %466 = vmatmul.f32.gmra.mxu0 %v448
    %v467 = vpop.f32.mrf.mxu0
    %v468 = vadd.f32 0.0, %v467
    %469 = vdwg.mxu0
    %v470 = vmul.f32 %v468, 0.002016129
    %v472 = vsel %vm227, %v438, 0
    %474 = vmatpush.msra.mxu0 0.0
    %475 = vmatpush.msra.mxu0 0.0
    %476 = vmatpush.msra.mxu0 0.0
    %477 = vmatpush.msra.mxu0 0.0
    %478 = vmatpush.msra.mxu0 0.0
    %479 = vmatpush.msra.mxu0 0.0
    %480 = vmatpush.msra.mxu0 0.0
    %481 = vmatpush.msra.mxu0 0.0
    %482 = vmatpush.msra.mxu0 %v446
    %483 = vmatpush.msra.mxu0 %v445
    %484 = vmatpush.msra.mxu0 %v444
    %485 = vmatpush.msra.mxu0 %v443
    %486 = vmatpush.msra.mxu0 %v442
    %487 = vmatpush.msra.mxu0 %v441
    %488 = vmatpush.msra.mxu0 %v440
    %489 = vmatpush.msra.mxu0 %v439
    %490 = vmatmul.f32.gmra.mxu0 %v472
    %v491 = vpop.f32.mrf.mxu0
    %v492 = vadd.f32 0.0, %v491
    %493 = vdwg.mxu0
    %v494 = vmul.f32 %v492, 0.002016129
    %v495 = vmul.f32 %v470, %v470
    %v496 = vsub.f32 %v494, %v495
    %v497 = vadd.f32 %v496, 1e-05
    %v498 = vrsqrt.pop %v497
    %v499 = vmul.f32 %v498, %v497
    %v500 = vmul.f32 %v499, %v498
    %v501 = vmul.f32 0.5, %v500
    %v502 = vsub.f32 1.5, %v501
    %v503 = vmul.f32 %v498, %v502
    %vm504 = vweird.f32 %v497
    %vm505 = vweird.f32 %v498
    %vm506 = vmor %vm504, %vm505
    %v507 = vsel %vm506, %v498, %v503
    %v508 = vperm.slane %v470, 0
    %v509 = vsub.f32 %v381, %v508
    %v510 = vsub.f32 %v382, %v508
    %v511 = vsub.f32 %v383, %v508
    %v512 = vsub.f32 %v384, %v508
    %v513 = vsub.f32 %v385, %v508
    %v514 = vsub.f32 %v386, %v508
    %v515 = vsub.f32 %v387, %v508
    %v516 = vsub.f32 %v388, %v508
    %v517 = vld [vmem:[#allocation7] sm:$0x1]
    %v518 = vmul.f32 %v507, %v517
    %v519 = vperm.slane %v518, 0
    %v520 = vmul.f32 %v509, %v519
    %v521 = vmul.f32 %v510, %v519
    %v522 = vmul.f32 %v511, %v519
    %v523 = vmul.f32 %v512, %v519
    %v524 = vmul.f32 %v513, %v519
    %v525 = vmul.f32 %v514, %v519
    %v526 = vmul.f32 %v515, %v519
    %v527 = vmul.f32 %v516, %v519
    %v528 = vld [vmem:[#allocation9] sm:$0x1]
    %v530 = vperm.slane %v528, 0
    %v532 = vadd.f32 %v520, %v530
    %v533 = vadd.f32 %v521, %v530
    %v534 = vadd.f32 %v522, %v530
    %v535 = vadd.f32 %v523, %v530
    %v536 = vadd.f32 %v524, %v530
    %v537 = vadd.f32 %v525, %v530
    %v538 = vadd.f32 %v526, %v530
    %v539 = vadd.f32 %v527, %v530
    %540 = vst.msk [vmem:[%s10] sm:$0xff] %vm227, %v532
    %541 = vst.msk [vmem:[%s10 + $0x8] sm:$0xff] %vm227, %v533
    %542 = vst.msk [vmem:[%s10 + $0x10] sm:$0xff] %vm227, %v534
    %543 = vst.msk [vmem:[%s10 + $0x18] sm:$0xff] %vm227, %v535
    %544 = vst.msk [vmem:[%s10 + $0x20] sm:$0xff] %vm227, %v536
    %545 = vst.msk [vmem:[%s10 + $0x28] sm:$0xff] %vm227, %v537
    %546 = vst.msk [vmem:[%s10 + $0x30] sm:$0xff] %vm227, %v538
    %547 = vst.msk [vmem:[%s10 + $0x38] sm:$0x3f] %vm235, %v539
    // Predicated region
    $region62: #{decoder_forward.2} parent=1 // pred_check
      _
    $region63: #{decoder_forward.2} parent=1 // pred_check_branch
      %549 = sbr.rel (0) target = $region65
    $region64: #{decoder_forward.2} parent=1 // pred_region
      _
    $region65: #{decoder_forward.2} parent=1 // pred_fallthru
      _
    // Predicated region
    $region66: #{decoder_forward.2} parent=1 // pred_check
      _
    $region67: #{decoder_forward.2} parent=1 // pred_check_branch
      %551 = sbr.rel (0) target = $region69
    $region68: #{decoder_forward.2} parent=1 // pred_region
      _
    $region69: #{decoder_forward.2} parent=1 // pred_fallthru
      _
    %552 = vsyncpa [#allocation3], 1
    %553 = vsyncpa [#allocation5], 1
    %554 = vsyncpa [#allocation8], 1

// kernel: decoder_forward.3
$region0: #{decoder_forward.3}
  #allocation0 [shape = 'u32[]', space=smem, size = 0x4, offset = 0x4, fixed_abs, tag = 'smem constant byte address 0x4 - core index']
  #allocation1 [shape = 'u32[72,128]{1,0:T(1,128)}', space=vmem, size = 0x9000, scoped, tag = 'internal scratch']
  %s0 = inlined_call_operand.vmem [shape: f32[2,248,8], index: 0, kind: input, shape index: {}]
  %s1 = inlined_call_operand.hbm [shape: f32[8,64], index: 1, kind: input, shape index: {}]
  %s2 = inlined_call_operand.hbm [shape: f32[1,32], index: 2, kind: input, shape index: {}]
  %s3 = inlined_call_operand.hbm [shape: f32[32,32], index: 3, kind: input, shape index: {}]
  %s4 = inlined_call_operand.hbm [shape: f32[1,32], index: 4, kind: input, shape index: {}]
  %s5 = inlined_call_operand.hbm [shape: f32[1,32], index: 5, kind: input, shape index: {}]
  %s6 = inlined_call_operand.vmem [shape: f32[498,32], index: 6, kind: output, shape index: {}]
  %s7 = sld [smem:[#allocation0]]
  $region54: #{decoder_forward.3} parent=0
    _
  %s9 = ssub.s32 1, %s7
  %s10 = scalar_select 0, %s9, %s7
  $region1: #{decoder_forward.3} parent=0
    #allocation2 [shape = 'u8[4096]{0}', space=vmem, size = 0x1000, scoped, tag = 'input window, operand 1, single buffered']
    #allocation3 [shape = 's32[1]{0}', space=sflag, size = 0x4, scoped, tag = 'scoped memory for decoder_forward.3']
    #allocation4 [shape = 'u8[512]{0}', space=vmem, size = 0x400, scoped, tag = 'input window, operand 2, single buffered']
    #allocation5 [shape = 's32[1]{0}', space=sflag, size = 0x4, scoped, tag = 'scoped memory for decoder_forward.3']
    #allocation6 [shape = 'u8[16384]{0}', space=vmem, size = 0x4000, scoped, tag = 'input window, operand 3, single buffered']
    #allocation7 [shape = 'u8[512]{0}', space=vmem, size = 0x400, scoped, tag = 'input window, operand 4, single buffered']
    #allocation8 [shape = 's32[1]{0}', space=sflag, size = 0x4, scoped, tag = 'scoped memory for decoder_forward.3']
    #allocation9 [shape = 'u8[512]{0}', space=vmem, size = 0x400, scoped, tag = 'input window, operand 5, single buffered']
    %11 = vsyncpa [#allocation3], 0
    %12 = vsyncpa [#allocation5], 0
    %13 = vsyncpa [#allocation8], 0
    // Predicated region
    $region2: #{decoder_forward.3} parent=1 // pred_check
      _
    $region3: #{decoder_forward.3} parent=1 // pred_check_branch
      %15 = sbr.rel (0) target = $region5
    $region4: #{decoder_forward.3} parent=1 // pred_region
      _
    $region5: #{decoder_forward.3} parent=1 // pred_fallthru
      _
    // Predicated region
    $region6: #{decoder_forward.3} parent=1 // pred_check
      _
    $region7: #{decoder_forward.3} parent=1 // pred_check_branch
      %17 = sbr.rel (0) target = $region9
    $region8: #{decoder_forward.3} parent=1 // pred_region
      %19 = vsyncadd [#allocation3], 0
      %s21 = sshll.u32 %s1, 4
      %s22 = int_to_ptr.hbm [resolvable:$true] %s21
      %s23 = sshll.u32 [#allocation2], 4
      %s24 = int_to_ptr.vmem [resolvable:$true] %s23
      %26 = dma.hbm_to_vmem [thread:$0]  %s22, 128, %s24, [#allocation3]
    $region9: #{decoder_forward.3} parent=1 // pred_fallthru
      _
    // Predicated region
    $region10: #{decoder_forward.3} parent=1 // pred_check
      _
    $region11: #{decoder_forward.3} parent=1 // pred_check_branch
      %28 = sbr.rel (0) target = $region13
    $region12: #{decoder_forward.3} parent=1 // pred_region
      %30 = vsyncadd [#allocation5], 0
      %s32 = sshll.u32 %s2, 4
      %s33 = int_to_ptr.hbm [resolvable:$true] %s32
      %s34 = sshll.u32 [#allocation4], 4
      %s35 = int_to_ptr.vmem [resolvable:$true] %s34
      %37 = dma.hbm_to_vmem [thread:$0]  %s33, 16, %s35, [#allocation5]
    $region13: #{decoder_forward.3} parent=1 // pred_fallthru
      _
    // Predicated region
    $region14: #{decoder_forward.3} parent=1 // pred_check
      _
    $region15: #{decoder_forward.3} parent=1 // pred_check_branch
      %39 = sbr.rel (0) target = $region17
    $region16: #{decoder_forward.3} parent=1 // pred_region
      %41 = vsyncadd [#allocation5], 0
      %s42 = sshll.u32 %s3, 4
      %s43 = int_to_ptr.hbm [resolvable:$true] %s42
      %s44 = sshll.u32 [#allocation6], 4
      %s45 = int_to_ptr.vmem [resolvable:$true] %s44
      %50 = dma.hbm_to_vmem [thread:$0]  %s43, 512, %s45, [#allocation5], 128, 128, 8
    $region17: #{decoder_forward.3} parent=1 // pred_fallthru
      _
    // Predicated region
    $region18: #{decoder_forward.3} parent=1 // pred_check
      _
    $region19: #{decoder_forward.3} parent=1 // pred_check_branch
      %52 = sbr.rel (0) target = $region21
    $region20: #{decoder_forward.3} parent=1 // pred_region
      %54 = vsyncadd [#allocation8], 0
      %s56 = sshll.u32 %s4, 4
      %s57 = int_to_ptr.hbm [resolvable:$true] %s56
      %s58 = sshll.u32 [#allocation7], 4
      %s59 = int_to_ptr.vmem [resolvable:$true] %s58
      %61 = dma.hbm_to_vmem [thread:$0]  %s57, 16, %s59, [#allocation8]
    $region21: #{decoder_forward.3} parent=1 // pred_fallthru
      _
    // Predicated region
    $region22: #{decoder_forward.3} parent=1 // pred_check
      _
    $region23: #{decoder_forward.3} parent=1 // pred_check_branch
      %63 = sbr.rel (0) target = $region25
    $region24: #{decoder_forward.3} parent=1 // pred_region
      %65 = vsyncadd [#allocation8], 0
      %s67 = sshll.u32 %s5, 4
      %s68 = int_to_ptr.hbm [resolvable:$true] %s67
      %s69 = sshll.u32 [#allocation9], 4
      %s70 = int_to_ptr.vmem [resolvable:$true] %s69
      %72 = dma.hbm_to_vmem [thread:$0]  %s68, 16, %s70, [#allocation8]
    $region25: #{decoder_forward.3} parent=1 // pred_fallthru
      _
    // Predicated region
    $region26: #{decoder_forward.3} parent=1 // pred_check
      _
    $region27: #{decoder_forward.3} parent=1 // pred_check_branch
      %74 = sbr.rel (0) target = $region29
    $region28: #{decoder_forward.3} parent=1 // pred_region
      %76 = dma.done [#allocation3], 128
    $region29: #{decoder_forward.3} parent=1 // pred_fallthru
      _
    // Predicated region
    $region30: #{decoder_forward.3} parent=1 // pred_check
      _
    $region31: #{decoder_forward.3} parent=1 // pred_check_branch
      %78 = sbr.rel (0) target = $region33
    $region32: #{decoder_forward.3} parent=1 // pred_region
      %80 = dma.done [#allocation5], 16
    $region33: #{decoder_forward.3} parent=1 // pred_fallthru
      _
    // Predicated region
    $region34: #{decoder_forward.3} parent=1 // pred_check
      _
    $region35: #{decoder_forward.3} parent=1 // pred_check_branch
      %82 = sbr.rel (0) target = $region37
    $region36: #{decoder_forward.3} parent=1 // pred_region
      %84 = dma.done [#allocation5], 512
    $region37: #{decoder_forward.3} parent=1 // pred_fallthru
      _
    // Predicated region
    $region38: #{decoder_forward.3} parent=1 // pred_check
      _
    $region39: #{decoder_forward.3} parent=1 // pred_check_branch
      %86 = sbr.rel (0) target = $region41
    $region40: #{decoder_forward.3} parent=1 // pred_region
      %88 = dma.done [#allocation8], 16
    $region41: #{decoder_forward.3} parent=1 // pred_fallthru
      _
    // Predicated region
    $region42: #{decoder_forward.3} parent=1 // pred_check
      _
    $region43: #{decoder_forward.3} parent=1 // pred_check_branch
      %90 = sbr.rel (0) target = $region45
    $region44: #{decoder_forward.3} parent=1 // pred_region
      %92 = dma.done [#allocation8], 16
    $region45: #{decoder_forward.3} parent=1 // pred_fallthru
      _
    %vm93 = vcmask 261120
    %94 = vst.msk [vmem:[%s6] sm:$0xff] %vm93, 0.0
    %95 = vst.msk [vmem:[%s6 + $0x8] sm:$0xff] %vm93, 0.0
    %96 = vst.msk [vmem:[%s6 + $0x10] sm:$0xff] %vm93, 0.0
    %97 = vst.msk [vmem:[%s6 + $0x18] sm:$0xff] %vm93, 0.0
    %98 = vst.msk [vmem:[%s6 + $0x20] sm:$0xff] %vm93, 0.0
    %99 = vst.msk [vmem:[%s6 + $0x28] sm:$0xff] %vm93, 0.0
    %100 = vst.msk [vmem:[%s6 + $0x30] sm:$0xff] %vm93, 0.0
    %101 = vst.msk [vmem:[%s6 + $0x38] sm:$0xff] %vm93, 0.0
    %102 = vst.msk [vmem:[%s6 + $0x40] sm:$0xff] %vm93, 0.0
    %103 = vst.msk [vmem:[%s6 + $0x48] sm:$0xff] %vm93, 0.0
    %104 = vst.msk [vmem:[%s6 + $0x50] sm:$0xff] %vm93, 0.0
    %105 = vst.msk [vmem:[%s6 + $0x58] sm:$0xff] %vm93, 0.0
    %106 = vst.msk [vmem:[%s6 + $0x60] sm:$0xff] %vm93, 0.0
    %107 = vst.msk [vmem:[%s6 + $0x68] sm:$0xff] %vm93, 0.0
    %108 = vst.msk [vmem:[%s6 + $0x70] sm:$0xff] %vm93, 0.0
    %109 = vst.msk [vmem:[%s6 + $0x78] sm:$0xff] %vm93, 0.0
    %110 = vst.msk [vmem:[%s6 + $0x80] sm:$0xff] %vm93, 0.0
    %111 = vst.msk [vmem:[%s6 + $0x88] sm:$0xff] %vm93, 0.0
    %112 = vst.msk [vmem:[%s6 + $0x90] sm:$0xff] %vm93, 0.0
    %113 = vst.msk [vmem:[%s6 + $0x98] sm:$0xff] %vm93, 0.0
    %114 = vst.msk [vmem:[%s6 + $0xa0] sm:$0xff] %vm93, 0.0
    %115 = vst.msk [vmem:[%s6 + $0xa8] sm:$0xff] %vm93, 0.0
    %116 = vst.msk [vmem:[%s6 + $0xb0] sm:$0xff] %vm93, 0.0
    %117 = vst.msk [vmem:[%s6 + $0xb8] sm:$0xff] %vm93, 0.0
    %118 = vst.msk [vmem:[%s6 + $0xc0] sm:$0xff] %vm93, 0.0
    %119 = vst.msk [vmem:[%s6 + $0xc8] sm:$0xff] %vm93, 0.0
    %120 = vst.msk [vmem:[%s6 + $0xd0] sm:$0xff] %vm93, 0.0
    %121 = vst.msk [vmem:[%s6 + $0xd8] sm:$0xff] %vm93, 0.0
    %122 = vst.msk [vmem:[%s6 + $0xe0] sm:$0xff] %vm93, 0.0
    %123 = vst.msk [vmem:[%s6 + $0xe8] sm:$0xff] %vm93, 0.0
    %124 = vst.msk [vmem:[%s6 + $0xf0] sm:$0xff] %vm93, 0.0
    %125 = vst.msk [vmem:[%s6 + $0xf8] sm:$0xff] %vm93, 0.0
    %126 = vst.msk [vmem:[%s6 + $0x100] sm:$0xff] %vm93, 0.0
    %127 = vst.msk [vmem:[%s6 + $0x108] sm:$0xff] %vm93, 0.0
    %128 = vst.msk [vmem:[%s6 + $0x110] sm:$0xff] %vm93, 0.0
    %129 = vst.msk [vmem:[%s6 + $0x118] sm:$0xff] %vm93, 0.0
    %130 = vst.msk [vmem:[%s6 + $0x120] sm:$0xff] %vm93, 0.0
    %131 = vst.msk [vmem:[%s6 + $0x128] sm:$0xff] %vm93, 0.0
    %132 = vst.msk [vmem:[%s6 + $0x130] sm:$0xff] %vm93, 0.0
    %133 = vst.msk [vmem:[%s6 + $0x138] sm:$0xff] %vm93, 0.0
    %134 = vst.msk [vmem:[%s6 + $0x140] sm:$0xff] %vm93, 0.0
    %135 = vst.msk [vmem:[%s6 + $0x148] sm:$0xff] %vm93, 0.0
    %136 = vst.msk [vmem:[%s6 + $0x150] sm:$0xff] %vm93, 0.0
    %137 = vst.msk [vmem:[%s6 + $0x158] sm:$0xff] %vm93, 0.0
    %138 = vst.msk [vmem:[%s6 + $0x160] sm:$0xff] %vm93, 0.0
    %139 = vst.msk [vmem:[%s6 + $0x168] sm:$0xff] %vm93, 0.0
    %140 = vst.msk [vmem:[%s6 + $0x170] sm:$0xff] %vm93, 0.0
    %141 = vst.msk [vmem:[%s6 + $0x178] sm:$0xff] %vm93, 0.0
    %142 = vst.msk [vmem:[%s6 + $0x180] sm:$0xff] %vm93, 0.0
    %143 = vst.msk [vmem:[%s6 + $0x188] sm:$0xff] %vm93, 0.0
    %144 = vst.msk [vmem:[%s6 + $0x190] sm:$0xff] %vm93, 0.0
    %145 = vst.msk [vmem:[%s6 + $0x198] sm:$0xff] %vm93, 0.0
    %146 = vst.msk [vmem:[%s6 + $0x1a0] sm:$0xff] %vm93, 0.0
    %147 = vst.msk [vmem:[%s6 + $0x1a8] sm:$0xff] %vm93, 0.0
    %148 = vst.msk [vmem:[%s6 + $0x1b0] sm:$0xff] %vm93, 0.0
    %149 = vst.msk [vmem:[%s6 + $0x1b8] sm:$0xff] %vm93, 0.0
    %150 = vst.msk [vmem:[%s6 + $0x1c0] sm:$0xff] %vm93, 0.0
    %151 = vst.msk [vmem:[%s6 + $0x1c8] sm:$0xff] %vm93, 0.0
    %152 = vst.msk [vmem:[%s6 + $0x1d0] sm:$0xff] %vm93, 0.0
    %153 = vst.msk [vmem:[%s6 + $0x1d8] sm:$0xff] %vm93, 0.0
    %154 = vst.msk [vmem:[%s6 + $0x1e0] sm:$0xff] %vm93, 0.0
    %155 = vst.msk [vmem:[%s6 + $0x1e8] sm:$0xff] %vm93, 0.0
    %vm156 = vcmask 254976
    %157 = vst.msk [vmem:[%s6 + $0x1f0] sm:$0x3] %vm156, 0.0
    %v158 = vld [vmem:[%s0] sm:$0xff]
    %v159 = vld [vmem:[%s0 + $0x8] sm:$0xff]
    %v160 = vld [vmem:[%s0 + $0x10] sm:$0xff]
    %v161 = vld [vmem:[%s0 + $0x18] sm:$0xff]
    %v162 = vld [vmem:[%s0 + $0x20] sm:$0xff]
    %v163 = vld [vmem:[%s0 + $0x28] sm:$0xff]
    %v164 = vld [vmem:[%s0 + $0x30] sm:$0xff]
    %v165 = vld [vmem:[%s0 + $0x38] sm:$0xff]
    %v166 = vld [vmem:[%s0 + $0x40] sm:$0xff]
    %v167 = vld [vmem:[%s0 + $0x48] sm:$0xff]
    %v168 = vld [vmem:[%s0 + $0x50] sm:$0xff]
    %v169 = vld [vmem:[%s0 + $0x58] sm:$0xff]
    %v170 = vld [vmem:[%s0 + $0x60] sm:$0xff]
    %v171 = vld [vmem:[%s0 + $0x68] sm:$0xff]
    %v172 = vld [vmem:[%s0 + $0x70] sm:$0xff]
    %v173 = vld [vmem:[%s0 + $0x78] sm:$0xff]
    %v174 = vld [vmem:[%s0 + $0x80] sm:$0xff]
    %v175 = vld [vmem:[%s0 + $0x88] sm:$0xff]
    %v176 = vld [vmem:[%s0 + $0x90] sm:$0xff]
    %v177 = vld [vmem:[%s0 + $0x98] sm:$0xff]
    %v178 = vld [vmem:[%s0 + $0xa0] sm:$0xff]
    %v179 = vld [vmem:[%s0 + $0xa8] sm:$0xff]
    %v180 = vld [vmem:[%s0 + $0xb0] sm:$0xff]
    %v181 = vld [vmem:[%s0 + $0xb8] sm:$0xff]
    %v182 = vld [vmem:[%s0 + $0xc0] sm:$0xff]
    %v183 = vld [vmem:[%s0 + $0xc8] sm:$0xff]
    %v184 = vld [vmem:[%s0 + $0xd0] sm:$0xff]
    %v185 = vld [vmem:[%s0 + $0xd8] sm:$0xff]
    %v186 = vld [vmem:[%s0 + $0xe0] sm:$0xff]
    %v187 = vld [vmem:[%s0 + $0xe8] sm:$0xff]
    %v188 = vld [vmem:[%s0 + $0xf0] sm:$0xff]
    %v189 = vld [vmem:[#allocation2] sm:$0xff]
    %vm190 = vcmask 64512
    %v192 = vsel %vm190, %v158, 0
    %v195 = vsel %vm190, %v159, 0
    %v198 = vsel %vm190, %v160, 0
    %v201 = vsel %vm190, %v161, 0
    %v204 = vsel %vm190, %v162, 0
    %v207 = vsel %vm190, %v163, 0
    %v210 = vsel %vm190, %v164, 0
    %v213 = vsel %vm190, %v165, 0
    %v216 = vsel %vm190, %v166, 0
    %v219 = vsel %vm190, %v167, 0
    %v222 = vsel %vm190, %v168, 0
    %v225 = vsel %vm190, %v169, 0
    %v228 = vsel %vm190, %v170, 0
    %v231 = vsel %vm190, %v171, 0
    %v234 = vsel %vm190, %v172, 0
    %v237 = vsel %vm190, %v173, 0
    %v240 = vsel %vm190, %v174, 0
    %v243 = vsel %vm190, %v175, 0
    %v246 = vsel %vm190, %v176, 0
    %v249 = vsel %vm190, %v177, 0
    %v252 = vsel %vm190, %v178, 0
    %v255 = vsel %vm190, %v179, 0
    %v258 = vsel %vm190, %v180, 0
    %v261 = vsel %vm190, %v181, 0
    %v264 = vsel %vm190, %v182, 0
    %v267 = vsel %vm190, %v183, 0
    %v270 = vsel %vm190, %v184, 0
    %v273 = vsel %vm190, %v185, 0
    %v276 = vsel %vm190, %v186, 0
    %v279 = vsel %vm190, %v187, 0
    %v282 = vsel %vm190, %v188, 0
    %284 = vmatpush.msra.mxu0 0.0
    %285 = vmatpush.msra.mxu0 0.0
    %286 = vmatpush.msra.mxu0 0.0
    %287 = vmatpush.msra.mxu0 0.0
    %288 = vmatpush.msra.mxu0 0.0
    %289 = vmatpush.msra.mxu0 0.0
    %290 = vmatpush.msra.mxu0 0.0
    %291 = vmatpush.msra.mxu0 0.0
    %292 = vmatpush.msra.mxu0 0.0
    %293 = vmatpush.msra.mxu0 0.0
    %294 = vmatpush.msra.mxu0 0.0
    %295 = vmatpush.msra.mxu0 0.0
    %296 = vmatpush.msra.mxu0 0.0
    %297 = vmatpush.msra.mxu0 0.0
    %298 = vmatpush.msra.mxu0 0.0
    %299 = vmatpush.msra.mxu0 %v189
    %300 = vmatmul.f32.gmra.mxu0 %v192
    %v301 = vpop.f32.mrf.mxu0
    %v302 = vadd.f32 0.0, %v301
    %303 = vmatmul.f32.gmra.mxu0 %v195
    %v304 = vpop.f32.mrf.mxu0
    %v305 = vadd.f32 0.0, %v304
    %306 = vmatmul.f32.gmra.mxu0 %v198
    %v307 = vpop.f32.mrf.mxu0
    %v308 = vadd.f32 0.0, %v307
    %309 = vmatmul.f32.gmra.mxu0 %v201
    %v310 = vpop.f32.mrf.mxu0
    %v311 = vadd.f32 0.0, %v310
    %312 = vmatmul.f32.gmra.mxu0 %v204
    %v313 = vpop.f32.mrf.mxu0
    %v314 = vadd.f32 0.0, %v313
    %315 = vmatmul.f32.gmra.mxu0 %v207
    %v316 = vpop.f32.mrf.mxu0
    %v317 = vadd.f32 0.0, %v316
    %318 = vmatmul.f32.gmra.mxu0 %v210
    %v319 = vpop.f32.mrf.mxu0
    %v320 = vadd.f32 0.0, %v319
    %321 = vmatmul.f32.gmra.mxu0 %v213
    %v322 = vpop.f32.mrf.mxu0
    %v323 = vadd.f32 0.0, %v322
    %324 = vmatmul.f32.gmra.mxu0 %v216
    %v325 = vpop.f32.mrf.mxu0
    %v326 = vadd.f32 0.0, %v325
    %327 = vmatmul.f32.gmra.mxu0 %v219
    %v328 = vpop.f32.mrf.mxu0
    %v329 = vadd.f32 0.0, %v328
    %330 = vmatmul.f32.gmra.mxu0 %v222
    %v331 = vpop.f32.mrf.mxu0
    %v332 = vadd.f32 0.0, %v331
    %333 = vmatmul.f32.gmra.mxu0 %v225
    %v334 = vpop.f32.mrf.mxu0
    %v335 = vadd.f32 0.0, %v334
    %336 = vmatmul.f32.gmra.mxu0 %v228
    %v337 = vpop.f32.mrf.mxu0
    %v338 = vadd.f32 0.0, %v337
    %339 = vmatmul.f32.gmra.mxu0 %v231
    %v340 = vpop.f32.mrf.mxu0
    %v341 = vadd.f32 0.0, %v340
    %342 = vmatmul.f32.gmra.mxu0 %v234
    %v343 = vpop.f32.mrf.mxu0
    %v344 = vadd.f32 0.0, %v343
    %345 = vmatmul.f32.gmra.mxu0 %v237
    %v346 = vpop.f32.mrf.mxu0
    %v347 = vadd.f32 0.0, %v346
    %348 = vmatmul.f32.gmra.mxu0 %v240
    %v349 = vpop.f32.mrf.mxu0
    %v350 = vadd.f32 0.0, %v349
    %351 = vmatmul.f32.gmra.mxu0 %v243
    %v352 = vpop.f32.mrf.mxu0
    %v353 = vadd.f32 0.0, %v352
    %354 = vmatmul.f32.gmra.mxu0 %v246
    %v355 = vpop.f32.mrf.mxu0
    %v356 = vadd.f32 0.0, %v355
    %357 = vmatmul.f32.gmra.mxu0 %v249
    %v358 = vpop.f32.mrf.mxu0
    %v359 = vadd.f32 0.0, %v358
    %360 = vmatmul.f32.gmra.mxu0 %v252
    %v361 = vpop.f32.mrf.mxu0
    %v362 = vadd.f32 0.0, %v361
    %363 = vmatmul.f32.gmra.mxu0 %v255
    %v364 = vpop.f32.mrf.mxu0
    %v365 = vadd.f32 0.0, %v364
    %366 = vmatmul.f32.gmra.mxu0 %v258
    %v367 = vpop.f32.mrf.mxu0
    %v368 = vadd.f32 0.0, %v367
    %369 = vmatmul.f32.gmra.mxu0 %v261
    %v370 = vpop.f32.mrf.mxu0
    %v371 = vadd.f32 0.0, %v370
    %372 = vmatmul.f32.gmra.mxu0 %v264
    %v373 = vpop.f32.mrf.mxu0
    %v374 = vadd.f32 0.0, %v373
    %375 = vmatmul.f32.gmra.mxu0 %v267
    %v376 = vpop.f32.mrf.mxu0
    %v377 = vadd.f32 0.0, %v376
    %378 = vmatmul.f32.gmra.mxu0 %v270
    %v379 = vpop.f32.mrf.mxu0
    %v380 = vadd.f32 0.0, %v379
    %381 = vmatmul.f32.gmra.mxu0 %v273
    %v382 = vpop.f32.mrf.mxu0
    %v383 = vadd.f32 0.0, %v382
    %384 = vmatmul.f32.gmra.mxu0 %v276
    %v385 = vpop.f32.mrf.mxu0
    %v386 = vadd.f32 0.0, %v385
    %387 = vmatmul.f32.gmra.mxu0 %v279
    %v388 = vpop.f32.mrf.mxu0
    %v389 = vadd.f32 0.0, %v388
    %390 = vmatmul.f32.gmra.mxu0 %v282
    %v391 = vpop.f32.mrf.mxu0
    %v392 = vadd.f32 0.0, %v391
    %393 = vdwg.mxu0
    %v394 = vld [vmem:[%s6] sm:$0xff]
    %v395 = vld [vmem:[%s6 + $0x8] sm:$0xff]
    %v396 = vld [vmem:[%s6 + $0x10] sm:$0xff]
    %v397 = vld [vmem:[%s6 + $0x18] sm:$0xff]
    %v398 = vld [vmem:[%s6 + $0x20] sm:$0xff]
    %v399 = vld [vmem:[%s6 + $0x28] sm:$0xff]
    %v400 = vld [vmem:[%s6 + $0x30] sm:$0xff]
    %v401 = vld [vmem:[%s6 + $0x38] sm:$0xff]
    %v402 = vld [vmem:[%s6 + $0x40] sm:$0xff]
    %v403 = vld [vmem:[%s6 + $0x48] sm:$0xff]
    %v404 = vld [vmem:[%s6 + $0x50] sm:$0xff]
    %v405 = vld [vmem:[%s6 + $0x58] sm:$0xff]
    %v406 = vld [vmem:[%s6 + $0x60] sm:$0xff]
    %v407 = vld [vmem:[%s6 + $0x68] sm:$0xff]
    %v408 = vld [vmem:[%s6 + $0x70] sm:$0xff]
    %v409 = vld [vmem:[%s6 + $0x78] sm:$0xff]
    %v410 = vld [vmem:[%s6 + $0x80] sm:$0xff]
    %v411 = vld [vmem:[%s6 + $0x88] sm:$0xff]
    %v412 = vld [vmem:[%s6 + $0x90] sm:$0xff]
    %v413 = vld [vmem:[%s6 + $0x98] sm:$0xff]
    %v414 = vld [vmem:[%s6 + $0xa0] sm:$0xff]
    %v415 = vld [vmem:[%s6 + $0xa8] sm:$0xff]
    %v416 = vld [vmem:[%s6 + $0xb0] sm:$0xff]
    %v417 = vld [vmem:[%s6 + $0xb8] sm:$0xff]
    %v418 = vld [vmem:[%s6 + $0xc0] sm:$0xff]
    %v419 = vld [vmem:[%s6 + $0xc8] sm:$0xff]
    %v420 = vld [vmem:[%s6 + $0xd0] sm:$0xff]
    %v421 = vld [vmem:[%s6 + $0xd8] sm:$0xff]
    %v422 = vld [vmem:[%s6 + $0xe0] sm:$0xff]
    %v423 = vld [vmem:[%s6 + $0xe8] sm:$0xff]
    %v424 = vld [vmem:[%s6 + $0xf0] sm:$0xff]
    %v425 = vadd.f32 %v394, %v302
    %v426 = vadd.f32 %v395, %v305
    %v427 = vadd.f32 %v396, %v308
    %v428 = vadd.f32 %v397, %v311
    %v429 = vadd.f32 %v398, %v314
    %v430 = vadd.f32 %v399, %v317
    %v431 = vadd.f32 %v400, %v320
    %v432 = vadd.f32 %v401, %v323
    %v433 = vadd.f32 %v402, %v326
    %v434 = vadd.f32 %v403, %v329
    %v435 = vadd.f32 %v404, %v332
    %v436 = vadd.f32 %v405, %v335
    %v437 = vadd.f32 %v406, %v338
    %v438 = vadd.f32 %v407, %v341
    %v439 = vadd.f32 %v408, %v344
    %v440 = vadd.f32 %v409, %v347
    %v441 = vadd.f32 %v410, %v350
    %v442 = vadd.f32 %v411, %v353
    %v443 = vadd.f32 %v412, %v356
    %v444 = vadd.f32 %v413, %v359
    %v445 = vadd.f32 %v414, %v362
    %v446 = vadd.f32 %v415, %v365
    %v447 = vadd.f32 %v416, %v368
    %v448 = vadd.f32 %v417, %v371
    %v449 = vadd.f32 %v418, %v374
    %v450 = vadd.f32 %v419, %v377
    %v451 = vadd.f32 %v420, %v380
    %v452 = vadd.f32 %v421, %v383
    %v453 = vadd.f32 %v422, %v386
    %v454 = vadd.f32 %v423, %v389
    %v455 = vadd.f32 %v424, %v392
    %456 = vst.msk [vmem:[%s6] sm:$0xff] %vm93, %v425
    %457 = vst.msk [vmem:[%s6 + $0x8] sm:$0xff] %vm93, %v426
    %458 = vst.msk [vmem:[%s6 + $0x10] sm:$0xff] %vm93, %v427
    %459 = vst.msk [vmem:[%s6 + $0x18] sm:$0xff] %vm93, %v428
    %460 = vst.msk [vmem:[%s6 + $0x20] sm:$0xff] %vm93, %v429
    %461 = vst.msk [vmem:[%s6 + $0x28] sm:$0xff] %vm93, %v430
    %462 = vst.msk [vmem:[%s6 + $0x30] sm:$0xff] %vm93, %v431
    %463 = vst.msk [vmem:[%s6 + $0x38] sm:$0xff] %vm93, %v432
    %464 = vst.msk [vmem:[%s6 + $0x40] sm:$0xff] %vm93, %v433
    %465 = vst.msk [vmem:[%s6 + $0x48] sm:$0xff] %vm93, %v434
    %466 = vst.msk [vmem:[%s6 + $0x50] sm:$0xff] %vm93, %v435
    %467 = vst.msk [vmem:[%s6 + $0x58] sm:$0xff] %vm93, %v436
    %468 = vst.msk [vmem:[%s6 + $0x60] sm:$0xff] %vm93, %v437
    %469 = vst.msk [vmem:[%s6 + $0x68] sm:$0xff] %vm93, %v438
    %470 = vst.msk [vmem:[%s6 + $0x70] sm:$0xff] %vm93, %v439
    %471 = vst.msk [vmem:[%s6 + $0x78] sm:$0xff] %vm93, %v440
    %472 = vst.msk [vmem:[%s6 + $0x80] sm:$0xff] %vm93, %v441
    %473 = vst.msk [vmem:[%s6 + $0x88] sm:$0xff] %vm93, %v442
    %474 = vst.msk [vmem:[%s6 + $0x90] sm:$0xff] %vm93, %v443
    %475 = vst.msk [vmem:[%s6 + $0x98] sm:$0xff] %vm93, %v444
    %476 = vst.msk [vmem:[%s6 + $0xa0] sm:$0xff] %vm93, %v445
    %477 = vst.msk [vmem:[%s6 + $0xa8] sm:$0xff] %vm93, %v446
    %478 = vst.msk [vmem:[%s6 + $0xb0] sm:$0xff] %vm93, %v447
    %479 = vst.msk [vmem:[%s6 + $0xb8] sm:$0xff] %vm93, %v448
    %480 = vst.msk [vmem:[%s6 + $0xc0] sm:$0xff] %vm93, %v449
    %481 = vst.msk [vmem:[%s6 + $0xc8] sm:$0xff] %vm93, %v450
    %482 = vst.msk [vmem:[%s6 + $0xd0] sm:$0xff] %vm93, %v451
    %483 = vst.msk [vmem:[%s6 + $0xd8] sm:$0xff] %vm93, %v452
    %484 = vst.msk [vmem:[%s6 + $0xe0] sm:$0xff] %vm93, %v453
    %485 = vst.msk [vmem:[%s6 + $0xe8] sm:$0xff] %vm93, %v454
    %486 = vst.msk [vmem:[%s6 + $0xf0] sm:$0xff] %vm93, %v455
    %v487 = vld [vmem:[%s6 + $0x1] sm:$0xff]
    %v488 = vld [vmem:[%s6 + $0x9] sm:$0xff]
    %v489 = vld [vmem:[%s6 + $0x11] sm:$0xff]
    %v490 = vld [vmem:[%s6 + $0x19] sm:$0xff]
    %v491 = vld [vmem:[%s6 + $0x21] sm:$0xff]
    %v492 = vld [vmem:[%s6 + $0x29] sm:$0xff]
    %v493 = vld [vmem:[%s6 + $0x31] sm:$0xff]
    %v494 = vld [vmem:[%s6 + $0x39] sm:$0xff]
    %v495 = vld [vmem:[%s6 + $0x41] sm:$0xff]
    %v496 = vld [vmem:[%s6 + $0x49] sm:$0xff]
    %v497 = vld [vmem:[%s6 + $0x51] sm:$0xff]
    %v498 = vld [vmem:[%s6 + $0x59] sm:$0xff]
    %v499 = vld [vmem:[%s6 + $0x61] sm:$0xff]
    %v500 = vld [vmem:[%s6 + $0x69] sm:$0xff]
    %v501 = vld [vmem:[%s6 + $0x71] sm:$0xff]
    %v502 = vld [vmem:[%s6 + $0x79] sm:$0xff]
    %v503 = vld [vmem:[%s6 + $0x81] sm:$0xff]
    %v504 = vld [vmem:[%s6 + $0x89] sm:$0xff]
    %v505 = vld [vmem:[%s6 + $0x91] sm:$0xff]
    %v506 = vld [vmem:[%s6 + $0x99] sm:$0xff]
    %v507 = vld [vmem:[%s6 + $0xa1] sm:$0xff]
    %v508 = vld [vmem:[%s6 + $0xa9] sm:$0xff]
    %v509 = vld [vmem:[%s6 + $0xb1] sm:$0xff]
    %v510 = vld [vmem:[%s6 + $0xb9] sm:$0xff]
    %v511 = vld [vmem:[%s6 + $0xc1] sm:$0xff]
    %v512 = vld [vmem:[%s6 + $0xc9] sm:$0xff]
    %v513 = vld [vmem:[%s6 + $0xd1] sm:$0xff]
    %v514 = vld [vmem:[%s6 + $0xd9] sm:$0xff]
    %v515 = vld [vmem:[%s6 + $0xe1] sm:$0xff]
    %v516 = vld [vmem:[%s6 + $0xe9] sm:$0xff]
    %v517 = vld [vmem:[%s6 + $0xf1] sm:$0xff]
    %549 = vrot.lane.b32.xlu0 %v302, 96
    %v550 = vpop.permute.xlu0 %549
    %551 = vrot.lane.b32.xlu0 %v305, 96
    %v552 = vpop.permute.xlu0 %551
    %553 = vrot.lane.b32.xlu0 %v308, 96
    %v554 = vpop.permute.xlu0 %553
    %555 = vrot.lane.b32.xlu0 %v311, 96
    %v556 = vpop.permute.xlu0 %555
    %557 = vrot.lane.b32.xlu0 %v314, 96
    %v558 = vpop.permute.xlu0 %557
    %559 = vrot.lane.b32.xlu0 %v317, 96
    %v560 = vpop.permute.xlu0 %559
    %561 = vrot.lane.b32.xlu0 %v320, 96
    %v562 = vpop.permute.xlu0 %561
    %563 = vrot.lane.b32.xlu0 %v323, 96
    %v564 = vpop.permute.xlu0 %563
    %565 = vrot.lane.b32.xlu0 %v326, 96
    %v566 = vpop.permute.xlu0 %565
    %567 = vrot.lane.b32.xlu0 %v329, 96
    %v568 = vpop.permute.xlu0 %567
    %569 = vrot.lane.b32.xlu0 %v332, 96
    %v570 = vpop.permute.xlu0 %569
    %571 = vrot.lane.b32.xlu0 %v335, 96
    %v572 = vpop.permute.xlu0 %571
    %573 = vrot.lane.b32.xlu0 %v338, 96
    %v574 = vpop.permute.xlu0 %573
    %575 = vrot.lane.b32.xlu0 %v341, 96
    %v576 = vpop.permute.xlu0 %575
    %577 = vrot.lane.b32.xlu0 %v344, 96
    %v578 = vpop.permute.xlu0 %577
    %579 = vrot.lane.b32.xlu0 %v347, 96
    %v580 = vpop.permute.xlu0 %579
    %581 = vrot.lane.b32.xlu0 %v350, 96
    %v582 = vpop.permute.xlu0 %581
    %583 = vrot.lane.b32.xlu0 %v353, 96
    %v584 = vpop.permute.xlu0 %583
    %585 = vrot.lane.b32.xlu0 %v356, 96
    %v586 = vpop.permute.xlu0 %585
    %587 = vrot.lane.b32.xlu0 %v359, 96
    %v588 = vpop.permute.xlu0 %587
    %589 = vrot.lane.b32.xlu0 %v362, 96
    %v590 = vpop.permute.xlu0 %589
    %591 = vrot.lane.b32.xlu0 %v365, 96
    %v592 = vpop.permute.xlu0 %591
    %593 = vrot.lane.b32.xlu0 %v368, 96
    %v594 = vpop.permute.xlu0 %593
    %595 = vrot.lane.b32.xlu0 %v371, 96
    %v596 = vpop.permute.xlu0 %595
    %597 = vrot.lane.b32.xlu0 %v374, 96
    %v598 = vpop.permute.xlu0 %597
    %599 = vrot.lane.b32.xlu0 %v377, 96
    %v600 = vpop.permute.xlu0 %599
    %601 = vrot.lane.b32.xlu0 %v380, 96
    %v602 = vpop.permute.xlu0 %601
    %603 = vrot.lane.b32.xlu0 %v383, 96
    %v604 = vpop.permute.xlu0 %603
    %605 = vrot.lane.b32.xlu0 %v386, 96
    %v606 = vpop.permute.xlu0 %605
    %607 = vrot.lane.b32.xlu0 %v389, 96
    %v608 = vpop.permute.xlu0 %607
    %609 = vrot.lane.b32.xlu0 %v392, 96
    %v610 = vpop.permute.xlu0 %609
    %v642 = vadd.f32 %v487, %v550
    %v643 = vadd.f32 %v488, %v552
    %v644 = vadd.f32 %v489, %v554
    %v645 = vadd.f32 %v490, %v556
    %v646 = vadd.f32 %v491, %v558
    %v647 = vadd.f32 %v492, %v560
    %v648 = vadd.f32 %v493, %v562
    %v649 = vadd.f32 %v494, %v564
    %v650 = vadd.f32 %v495, %v566
    %v651 = vadd.f32 %v496, %v568
    %v652 = vadd.f32 %v497, %v570
    %v653 = vadd.f32 %v498, %v572
    %v654 = vadd.f32 %v499, %v574
    %v655 = vadd.f32 %v500, %v576
    %v656 = vadd.f32 %v501, %v578
    %v657 = vadd.f32 %v502, %v580
    %v658 = vadd.f32 %v503, %v582
    %v659 = vadd.f32 %v504, %v584
    %v660 = vadd.f32 %v505, %v586
    %v661 = vadd.f32 %v506, %v588
    %v662 = vadd.f32 %v507, %v590
    %v663 = vadd.f32 %v508, %v592
    %v664 = vadd.f32 %v509, %v594
    %v665 = vadd.f32 %v510, %v596
    %v666 = vadd.f32 %v511, %v598
    %v667 = vadd.f32 %v512, %v600
    %v668 = vadd.f32 %v513, %v602
    %v669 = vadd.f32 %v514, %v604
    %v670 = vadd.f32 %v515, %v606
    %v671 = vadd.f32 %v516, %v608
    %v672 = vadd.f32 %v517, %v610
    %673 = vst.msk [vmem:[%s6 + $0x1] sm:$0xff] %vm93, %v642
    %674 = vst.msk [vmem:[%s6 + $0x9] sm:$0xff] %vm93, %v643
    %675 = vst.msk [vmem:[%s6 + $0x11] sm:$0xff] %vm93, %v644
    %676 = vst.msk [vmem:[%s6 + $0x19] sm:$0xff] %vm93, %v645
    %677 = vst.msk [vmem:[%s6 + $0x21] sm:$0xff] %vm93, %v646
    %678 = vst.msk [vmem:[%s6 + $0x29] sm:$0xff] %vm93, %v647
    %679 = vst.msk [vmem:[%s6 + $0x31] sm:$0xff] %vm93, %v648
    %680 = vst.msk [vmem:[%s6 + $0x39] sm:$0xff] %vm93, %v649
    %681 = vst.msk [vmem:[%s6 + $0x41] sm:$0xff] %vm93, %v650
    %682 = vst.msk [vmem:[%s6 + $0x49] sm:$0xff] %vm93, %v651
    %683 = vst.msk [vmem:[%s6 + $0x51] sm:$0xff] %vm93, %v652
    %684 = vst.msk [vmem:[%s6 + $0x59] sm:$0xff] %vm93, %v653
    %685 = vst.msk [vmem:[%s6 + $0x61] sm:$0xff] %vm93, %v654
    %686 = vst.msk [vmem:[%s6 + $0x69] sm:$0xff] %vm93, %v655
    %687 = vst.msk [vmem:[%s6 + $0x71] sm:$0xff] %vm93, %v656
    %688 = vst.msk [vmem:[%s6 + $0x79] sm:$0xff] %vm93, %v657
    %689 = vst.msk [vmem:[%s6 + $0x81] sm:$0xff] %vm93, %v658
    %690 = vst.msk [vmem:[%s6 + $0x89] sm:$0xff] %vm93, %v659
    %691 = vst.msk [vmem:[%s6 + $0x91] sm:$0xff] %vm93, %v660
    %692 = vst.msk [vmem:[%s6 + $0x99] sm:$0xff] %vm93, %v661
    %693 = vst.msk [vmem:[%s6 + $0xa1] sm:$0xff] %vm93, %v662
    %694 = vst.msk [vmem:[%s6 + $0xa9] sm:$0xff] %vm93, %v663
    %695 = vst.msk [vmem:[%s6 + $0xb1] sm:$0xff] %vm93, %v664
    %696 = vst.msk [vmem:[%s6 + $0xb9] sm:$0xff] %vm93, %v665
    %697 = vst.msk [vmem:[%s6 + $0xc1] sm:$0xff] %vm93, %v666
    %698 = vst.msk [vmem:[%s6 + $0xc9] sm:$0xff] %vm93, %v667
    %699 = vst.msk [vmem:[%s6 + $0xd1] sm:$0xff] %vm93, %v668
    %700 = vst.msk [vmem:[%s6 + $0xd9] sm:$0xff] %vm93, %v669
    %701 = vst.msk [vmem:[%s6 + $0xe1] sm:$0xff] %vm93, %v670
    %702 = vst.msk [vmem:[%s6 + $0xe9] sm:$0xff] %vm93, %v671
    %703 = vst.msk [vmem:[%s6 + $0xf1] sm:$0xff] %vm93, %v672
    %s704 = scalar_lea.vmem %s0, 248
    %v705 = vld [vmem:[%s704] sm:$0xff]
    %v706 = vld [vmem:[%s704 + $0x8] sm:$0xff]
    %v707 = vld [vmem:[%s704 + $0x10] sm:$0xff]
    %v708 = vld [vmem:[%s704 + $0x18] sm:$0xff]
    %v709 = vld [vmem:[%s704 + $0x20] sm:$0xff]
    %v710 = vld [vmem:[%s704 + $0x28] sm:$0xff]
    %v711 = vld [vmem:[%s704 + $0x30] sm:$0xff]
    %v712 = vld [vmem:[%s704 + $0x38] sm:$0xff]
    %v713 = vld [vmem:[%s704 + $0x40] sm:$0xff]
    %v714 = vld [vmem:[%s704 + $0x48] sm:$0xff]
    %v715 = vld [vmem:[%s704 + $0x50] sm:$0xff]
    %v716 = vld [vmem:[%s704 + $0x58] sm:$0xff]
    %v717 = vld [vmem:[%s704 + $0x60] sm:$0xff]
    %v718 = vld [vmem:[%s704 + $0x68] sm:$0xff]
    %v719 = vld [vmem:[%s704 + $0x70] sm:$0xff]
    %v720 = vld [vmem:[%s704 + $0x78] sm:$0xff]
    %v721 = vld [vmem:[%s704 + $0x80] sm:$0xff]
    %v722 = vld [vmem:[%s704 + $0x88] sm:$0xff]
    %v723 = vld [vmem:[%s704 + $0x90] sm:$0xff]
    %v724 = vld [vmem:[%s704 + $0x98] sm:$0xff]
    %v725 = vld [vmem:[%s704 + $0xa0] sm:$0xff]
    %v726 = vld [vmem:[%s704 + $0xa8] sm:$0xff]
    %v727 = vld [vmem:[%s704 + $0xb0] sm:$0xff]
    %v728 = vld [vmem:[%s704 + $0xb8] sm:$0xff]
    %v729 = vld [vmem:[%s704 + $0xc0] sm:$0xff]
    %v730 = vld [vmem:[%s704 + $0xc8] sm:$0xff]
    %v731 = vld [vmem:[%s704 + $0xd0] sm:$0xff]
    %v732 = vld [vmem:[%s704 + $0xd8] sm:$0xff]
    %v733 = vld [vmem:[%s704 + $0xe0] sm:$0xff]
    %v734 = vld [vmem:[%s704 + $0xe8] sm:$0xff]
    %v735 = vld [vmem:[%s704 + $0xf0] sm:$0xff]
    %v736 = vld [vmem:[#allocation2] sm:$0xff]
    %v738 = vsel %vm190, %v705, 0
    %v741 = vsel %vm190, %v706, 0
    %v744 = vsel %vm190, %v707, 0
    %v747 = vsel %vm190, %v708, 0
    %v750 = vsel %vm190, %v709, 0
    %v753 = vsel %vm190, %v710, 0
    %v756 = vsel %vm190, %v711, 0
    %v759 = vsel %vm190, %v712, 0
    %v762 = vsel %vm190, %v713, 0
    %v765 = vsel %vm190, %v714, 0
    %v768 = vsel %vm190, %v715, 0
    %v771 = vsel %vm190, %v716, 0
    %v774 = vsel %vm190, %v717, 0
    %v777 = vsel %vm190, %v718, 0
    %v780 = vsel %vm190, %v719, 0
    %v783 = vsel %vm190, %v720, 0
    %v786 = vsel %vm190, %v721, 0
    %v789 = vsel %vm190, %v722, 0
    %v792 = vsel %vm190, %v723, 0
    %v795 = vsel %vm190, %v724, 0
    %v798 = vsel %vm190, %v725, 0
    %v801 = vsel %vm190, %v726, 0
    %v804 = vsel %vm190, %v727, 0
    %v807 = vsel %vm190, %v728, 0
    %v810 = vsel %vm190, %v729, 0
    %v813 = vsel %vm190, %v730, 0
    %v816 = vsel %vm190, %v731, 0
    %v819 = vsel %vm190, %v732, 0
    %v822 = vsel %vm190, %v733, 0
    %v825 = vsel %vm190, %v734, 0
    %v828 = vsel %vm190, %v735, 0
    %830 = vmatpush.msra.mxu0 0.0
    %831 = vmatpush.msra.mxu0 0.0
    %832 = vmatpush.msra.mxu0 0.0
    %833 = vmatpush.msra.mxu0 0.0
    %834 = vmatpush.msra.mxu0 0.0
    %835 = vmatpush.msra.mxu0 0.0
    %836 = vmatpush.msra.mxu0 0.0
    %837 = vmatpush.msra.mxu0 0.0
    %838 = vmatpush.msra.mxu0 0.0
    %839 = vmatpush.msra.mxu0 0.0
    %840 = vmatpush.msra.mxu0 0.0
    %841 = vmatpush.msra.mxu0 0.0
    %842 = vmatpush.msra.mxu0 0.0
    %843 = vmatpush.msra.mxu0 0.0
    %844 = vmatpush.msra.mxu0 0.0
    %845 = vmatpush.msra.mxu0 %v736
    %846 = vmatmul.f32.gmra.mxu0 %v738
    %v847 = vpop.f32.mrf.mxu0
    %v848 = vadd.f32 0.0, %v847
    %849 = vmatmul.f32.gmra.mxu0 %v741
    %v850 = vpop.f32.mrf.mxu0
    %v851 = vadd.f32 0.0, %v850
    %852 = vmatmul.f32.gmra.mxu0 %v744
    %v853 = vpop.f32.mrf.mxu0
    %v854 = vadd.f32 0.0, %v853
    %855 = vmatmul.f32.gmra.mxu0 %v747
    %v856 = vpop.f32.mrf.mxu0
    %v857 = vadd.f32 0.0, %v856
    %858 = vmatmul.f32.gmra.mxu0 %v750
    %v859 = vpop.f32.mrf.mxu0
    %v860 = vadd.f32 0.0, %v859
    %861 = vmatmul.f32.gmra.mxu0 %v753
    %v862 = vpop.f32.mrf.mxu0
    %v863 = vadd.f32 0.0, %v862
    %864 = vmatmul.f32.gmra.mxu0 %v756
    %v865 = vpop.f32.mrf.mxu0
    %v866 = vadd.f32 0.0, %v865
    %867 = vmatmul.f32.gmra.mxu0 %v759
    %v868 = vpop.f32.mrf.mxu0
    %v869 = vadd.f32 0.0, %v868
    %870 = vmatmul.f32.gmra.mxu0 %v762
    %v871 = vpop.f32.mrf.mxu0
    %v872 = vadd.f32 0.0, %v871
    %873 = vmatmul.f32.gmra.mxu0 %v765
    %v874 = vpop.f32.mrf.mxu0
    %v875 = vadd.f32 0.0, %v874
    %876 = vmatmul.f32.gmra.mxu0 %v768
    %v877 = vpop.f32.mrf.mxu0
    %v878 = vadd.f32 0.0, %v877
    %879 = vmatmul.f32.gmra.mxu0 %v771
    %v880 = vpop.f32.mrf.mxu0
    %v881 = vadd.f32 0.0, %v880
    %882 = vmatmul.f32.gmra.mxu0 %v774
    %v883 = vpop.f32.mrf.mxu0
    %v884 = vadd.f32 0.0, %v883
    %885 = vmatmul.f32.gmra.mxu0 %v777
    %v886 = vpop.f32.mrf.mxu0
    %v887 = vadd.f32 0.0, %v886
    %888 = vmatmul.f32.gmra.mxu0 %v780
    %v889 = vpop.f32.mrf.mxu0
    %v890 = vadd.f32 0.0, %v889
    %891 = vmatmul.f32.gmra.mxu0 %v783
    %v892 = vpop.f32.mrf.mxu0
    %v893 = vadd.f32 0.0, %v892
    %894 = vmatmul.f32.gmra.mxu0 %v786
    %v895 = vpop.f32.mrf.mxu0
    %v896 = vadd.f32 0.0, %v895
    %897 = vmatmul.f32.gmra.mxu0 %v789
    %v898 = vpop.f32.mrf.mxu0
    %v899 = vadd.f32 0.0, %v898
    %900 = vmatmul.f32.gmra.mxu0 %v792
    %v901 = vpop.f32.mrf.mxu0
    %v902 = vadd.f32 0.0, %v901
    %903 = vmatmul.f32.gmra.mxu0 %v795
    %v904 = vpop.f32.mrf.mxu0
    %v905 = vadd.f32 0.0, %v904
    %906 = vmatmul.f32.gmra.mxu0 %v798
    %v907 = vpop.f32.mrf.mxu0
    %v908 = vadd.f32 0.0, %v907
    %909 = vmatmul.f32.gmra.mxu0 %v801
    %v910 = vpop.f32.mrf.mxu0
    %v911 = vadd.f32 0.0, %v910
    %912 = vmatmul.f32.gmra.mxu0 %v804
    %v913 = vpop.f32.mrf.mxu0
    %v914 = vadd.f32 0.0, %v913
    %915 = vmatmul.f32.gmra.mxu0 %v807
    %v916 = vpop.f32.mrf.mxu0
    %v917 = vadd.f32 0.0, %v916
    %918 = vmatmul.f32.gmra.mxu0 %v810
    %v919 = vpop.f32.mrf.mxu0
    %v920 = vadd.f32 0.0, %v919
    %921 = vmatmul.f32.gmra.mxu0 %v813
    %v922 = vpop.f32.mrf.mxu0
    %v923 = vadd.f32 0.0, %v922
    %924 = vmatmul.f32.gmra.mxu0 %v816
    %v925 = vpop.f32.mrf.mxu0
    %v926 = vadd.f32 0.0, %v925
    %927 = vmatmul.f32.gmra.mxu0 %v819
    %v928 = vpop.f32.mrf.mxu0
    %v929 = vadd.f32 0.0, %v928
    %930 = vmatmul.f32.gmra.mxu0 %v822
    %v931 = vpop.f32.mrf.mxu0
    %v932 = vadd.f32 0.0, %v931
    %933 = vmatmul.f32.gmra.mxu0 %v825
    %v934 = vpop.f32.mrf.mxu0
    %v935 = vadd.f32 0.0, %v934
    %936 = vmatmul.f32.gmra.mxu0 %v828
    %v937 = vpop.f32.mrf.mxu0
    %v938 = vadd.f32 0.0, %v937
    %939 = vdwg.mxu0
    %v940 = vld [vmem:[%s6 + $0xf9] sm:$0xff]
    %v941 = vld [vmem:[%s6 + $0x101] sm:$0xff]
    %v942 = vld [vmem:[%s6 + $0x109] sm:$0xff]
    %v943 = vld [vmem:[%s6 + $0x111] sm:$0xff]
    %v944 = vld [vmem:[%s6 + $0x119] sm:$0xff]
    %v945 = vld [vmem:[%s6 + $0x121] sm:$0xff]
    %v946 = vld [vmem:[%s6 + $0x129] sm:$0xff]
    %v947 = vld [vmem:[%s6 + $0x131] sm:$0xff]
    %v948 = vld [vmem:[%s6 + $0x139] sm:$0xff]
    %v949 = vld [vmem:[%s6 + $0x141] sm:$0xff]
    %v950 = vld [vmem:[%s6 + $0x149] sm:$0xff]
    %v951 = vld [vmem:[%s6 + $0x151] sm:$0xff]
    %v952 = vld [vmem:[%s6 + $0x159] sm:$0xff]
    %v953 = vld [vmem:[%s6 + $0x161] sm:$0xff]
    %v954 = vld [vmem:[%s6 + $0x169] sm:$0xff]
    %v955 = vld [vmem:[%s6 + $0x171] sm:$0xff]
    %v956 = vld [vmem:[%s6 + $0x179] sm:$0xff]
    %v957 = vld [vmem:[%s6 + $0x181] sm:$0xff]
    %v958 = vld [vmem:[%s6 + $0x189] sm:$0xff]
    %v959 = vld [vmem:[%s6 + $0x191] sm:$0xff]
    %v960 = vld [vmem:[%s6 + $0x199] sm:$0xff]
    %v961 = vld [vmem:[%s6 + $0x1a1] sm:$0xff]
    %v962 = vld [vmem:[%s6 + $0x1a9] sm:$0xff]
    %v963 = vld [vmem:[%s6 + $0x1b1] sm:$0xff]
    %v964 = vld [vmem:[%s6 + $0x1b9] sm:$0xff]
    %v965 = vld [vmem:[%s6 + $0x1c1] sm:$0xff]
    %v966 = vld [vmem:[%s6 + $0x1c9] sm:$0xff]
    %v967 = vld [vmem:[%s6 + $0x1d1] sm:$0xff]
    %v968 = vld [vmem:[%s6 + $0x1d9] sm:$0xff]
    %v969 = vld [vmem:[%s6 + $0x1e1] sm:$0xff]
    %v970 = vld [vmem:[%s6 + $0x1e9] sm:$0xff]
    %v971 = vadd.f32 %v940, %v848
    %v972 = vadd.f32 %v941, %v851
    %v973 = vadd.f32 %v942, %v854
    %v974 = vadd.f32 %v943, %v857
    %v975 = vadd.f32 %v944, %v860
    %v976 = vadd.f32 %v945, %v863
    %v977 = vadd.f32 %v946, %v866
    %v978 = vadd.f32 %v947, %v869
    %v979 = vadd.f32 %v948, %v872
    %v980 = vadd.f32 %v949, %v875
    %v981 = vadd.f32 %v950, %v878
    %v982 = vadd.f32 %v951, %v881
    %v983 = vadd.f32 %v952, %v884
    %v984 = vadd.f32 %v953, %v887
    %v985 = vadd.f32 %v954, %v890
    %v986 = vadd.f32 %v955, %v893
    %v987 = vadd.f32 %v956, %v896
    %v988 = vadd.f32 %v957, %v899
    %v989 = vadd.f32 %v958, %v902
    %v990 = vadd.f32 %v959, %v905
    %v991 = vadd.f32 %v960, %v908
    %v992 = vadd.f32 %v961, %v911
    %v993 = vadd.f32 %v962, %v914
    %v994 = vadd.f32 %v963, %v917
    %v995 = vadd.f32 %v964, %v920
    %v996 = vadd.f32 %v965, %v923
    %v997 = vadd.f32 %v966, %v926
    %v998 = vadd.f32 %v967, %v929
    %v999 = vadd.f32 %v968, %v932
    %v1000 = vadd.f32 %v969, %v935
    %v1001 = vadd.f32 %v970, %v938
    %1002 = vst.msk [vmem:[%s6 + $0xf9] sm:$0xff] %vm93, %v971
    %1003 = vst.msk [vmem:[%s6 + $0x101] sm:$0xff] %vm93, %v972
    %1004 = vst.msk [vmem:[%s6 + $0x109] sm:$0xff] %vm93, %v973
    %1005 = vst.msk [vmem:[%s6 + $0x111] sm:$0xff] %vm93, %v974
    %1006 = vst.msk [vmem:[%s6 + $0x119] sm:$0xff] %vm93, %v975
    %1007 = vst.msk [vmem:[%s6 + $0x121] sm:$0xff] %vm93, %v976
    %1008 = vst.msk [vmem:[%s6 + $0x129] sm:$0xff] %vm93, %v977
    %1009 = vst.msk [vmem:[%s6 + $0x131] sm:$0xff] %vm93, %v978
    %1010 = vst.msk [vmem:[%s6 + $0x139] sm:$0xff] %vm93, %v979
    %1011 = vst.msk [vmem:[%s6 + $0x141] sm:$0xff] %vm93, %v980
    %1012 = vst.msk [vmem:[%s6 + $0x149] sm:$0xff] %vm93, %v981
    %1013 = vst.msk [vmem:[%s6 + $0x151] sm:$0xff] %vm93, %v982
    %1014 = vst.msk [vmem:[%s6 + $0x159] sm:$0xff] %vm93, %v983
    %1015 = vst.msk [vmem:[%s6 + $0x161] sm:$0xff] %vm93, %v984
    %1016 = vst.msk [vmem:[%s6 + $0x169] sm:$0xff] %vm93, %v985
    %1017 = vst.msk [vmem:[%s6 + $0x171] sm:$0xff] %vm93, %v986
    %1018 = vst.msk [vmem:[%s6 + $0x179] sm:$0xff] %vm93, %v987
    %1019 = vst.msk [vmem:[%s6 + $0x181] sm:$0xff] %vm93, %v988
    %1020 = vst.msk [vmem:[%s6 + $0x189] sm:$0xff] %vm93, %v989
    %1021 = vst.msk [vmem:[%s6 + $0x191] sm:$0xff] %vm93, %v990
    %1022 = vst.msk [vmem:[%s6 + $0x199] sm:$0xff] %vm93, %v991
    %1023 = vst.msk [vmem:[%s6 + $0x1a1] sm:$0xff] %vm93, %v992
    %1024 = vst.msk [vmem:[%s6 + $0x1a9] sm:$0xff] %vm93, %v993
    %1025 = vst.msk [vmem:[%s6 + $0x1b1] sm:$0xff] %vm93, %v994
    %1026 = vst.msk [vmem:[%s6 + $0x1b9] sm:$0xff] %vm93, %v995
    %1027 = vst.msk [vmem:[%s6 + $0x1c1] sm:$0xff] %vm93, %v996
    %1028 = vst.msk [vmem:[%s6 + $0x1c9] sm:$0xff] %vm93, %v997
    %1029 = vst.msk [vmem:[%s6 + $0x1d1] sm:$0xff] %vm93, %v998
    %1030 = vst.msk [vmem:[%s6 + $0x1d9] sm:$0xff] %vm93, %v999
    %1031 = vst.msk [vmem:[%s6 + $0x1e1] sm:$0xff] %vm93, %v1000
    %1032 = vst.msk [vmem:[%s6 + $0x1e9] sm:$0xff] %vm93, %v1001
    %v1033 = vld [vmem:[%s6 + $0xfa] sm:$0xff]
    %v1034 = vld [vmem:[%s6 + $0x102] sm:$0xff]
    %v1035 = vld [vmem:[%s6 + $0x10a] sm:$0xff]
    %v1036 = vld [vmem:[%s6 + $0x112] sm:$0xff]
    %v1037 = vld [vmem:[%s6 + $0x11a] sm:$0xff]
    %v1038 = vld [vmem:[%s6 + $0x122] sm:$0xff]
    %v1039 = vld [vmem:[%s6 + $0x12a] sm:$0xff]
    %v1040 = vld [vmem:[%s6 + $0x132] sm:$0xff]
    %v1041 = vld [vmem:[%s6 + $0x13a] sm:$0xff]
    %v1042 = vld [vmem:[%s6 + $0x142] sm:$0xff]
    %v1043 = vld [vmem:[%s6 + $0x14a] sm:$0xff]
    %v1044 = vld [vmem:[%s6 + $0x152] sm:$0xff]
    %v1045 = vld [vmem:[%s6 + $0x15a] sm:$0xff]
    %v1046 = vld [vmem:[%s6 + $0x162] sm:$0xff]
    %v1047 = vld [vmem:[%s6 + $0x16a] sm:$0xff]
    %v1048 = vld [vmem:[%s6 + $0x172] sm:$0xff]
    %v1049 = vld [vmem:[%s6 + $0x17a] sm:$0xff]
    %v1050 = vld [vmem:[%s6 + $0x182] sm:$0xff]
    %v1051 = vld [vmem:[%s6 + $0x18a] sm:$0xff]
    %v1052 = vld [vmem:[%s6 + $0x192] sm:$0xff]
    %v1053 = vld [vmem:[%s6 + $0x19a] sm:$0xff]
    %v1054 = vld [vmem:[%s6 + $0x1a2] sm:$0xff]
    %v1055 = vld [vmem:[%s6 + $0x1aa] sm:$0xff]
    %v1056 = vld [vmem:[%s6 + $0x1b2] sm:$0xff]
    %v1057 = vld [vmem:[%s6 + $0x1ba] sm:$0xff]
    %v1058 = vld [vmem:[%s6 + $0x1c2] sm:$0xff]
    %v1059 = vld [vmem:[%s6 + $0x1ca] sm:$0xff]
    %v1060 = vld [vmem:[%s6 + $0x1d2] sm:$0xff]
    %v1061 = vld [vmem:[%s6 + $0x1da] sm:$0xff]
    %v1062 = vld [vmem:[%s6 + $0x1e2] sm:$0xff]
    %v1063 = vld [vmem:[%s6 + $0x1ea] sm:$0xff]
    %1095 = vrot.lane.b32.xlu0 %v848, 96
    %v1096 = vpop.permute.xlu0 %1095
    %1097 = vrot.lane.b32.xlu0 %v851, 96
    %v1098 = vpop.permute.xlu0 %1097
    %1099 = vrot.lane.b32.xlu0 %v854, 96
    %v1100 = vpop.permute.xlu0 %1099
    %1101 = vrot.lane.b32.xlu0 %v857, 96
    %v1102 = vpop.permute.xlu0 %1101
    %1103 = vrot.lane.b32.xlu0 %v860, 96
    %v1104 = vpop.permute.xlu0 %1103
    %1105 = vrot.lane.b32.xlu0 %v863, 96
    %v1106 = vpop.permute.xlu0 %1105
    %1107 = vrot.lane.b32.xlu0 %v866, 96
    %v1108 = vpop.permute.xlu0 %1107
    %1109 = vrot.lane.b32.xlu0 %v869, 96
    %v1110 = vpop.permute.xlu0 %1109
    %1111 = vrot.lane.b32.xlu0 %v872, 96
    %v1112 = vpop.permute.xlu0 %1111
    %1113 = vrot.lane.b32.xlu0 %v875, 96
    %v1114 = vpop.permute.xlu0 %1113
    %1115 = vrot.lane.b32.xlu0 %v878, 96
    %v1116 = vpop.permute.xlu0 %1115
    %1117 = vrot.lane.b32.xlu0 %v881, 96
    %v1118 = vpop.permute.xlu0 %1117
    %1119 = vrot.lane.b32.xlu0 %v884, 96
    %v1120 = vpop.permute.xlu0 %1119
    %1121 = vrot.lane.b32.xlu0 %v887, 96
    %v1122 = vpop.permute.xlu0 %1121
    %1123 = vrot.lane.b32.xlu0 %v890, 96
    %v1124 = vpop.permute.xlu0 %1123
    %1125 = vrot.lane.b32.xlu0 %v893, 96
    %v1126 = vpop.permute.xlu0 %1125
    %1127 = vrot.lane.b32.xlu0 %v896, 96
    %v1128 = vpop.permute.xlu0 %1127
    %1129 = vrot.lane.b32.xlu0 %v899, 96
    %v1130 = vpop.permute.xlu0 %1129
    %1131 = vrot.lane.b32.xlu0 %v902, 96
    %v1132 = vpop.permute.xlu0 %1131
    %1133 = vrot.lane.b32.xlu0 %v905, 96
    %v1134 = vpop.permute.xlu0 %1133
    %1135 = vrot.lane.b32.xlu0 %v908, 96
    %v1136 = vpop.permute.xlu0 %1135
    %1137 = vrot.lane.b32.xlu0 %v911, 96
    %v1138 = vpop.permute.xlu0 %1137
    %1139 = vrot.lane.b32.xlu0 %v914, 96
    %v1140 = vpop.permute.xlu0 %1139
    %1141 = vrot.lane.b32.xlu0 %v917, 96
    %v1142 = vpop.permute.xlu0 %1141
    %1143 = vrot.lane.b32.xlu0 %v920, 96
    %v1144 = vpop.permute.xlu0 %1143
    %1145 = vrot.lane.b32.xlu0 %v923, 96
    %v1146 = vpop.permute.xlu0 %1145
    %1147 = vrot.lane.b32.xlu0 %v926, 96
    %v1148 = vpop.permute.xlu0 %1147
    %1149 = vrot.lane.b32.xlu0 %v929, 96
    %v1150 = vpop.permute.xlu0 %1149
    %1151 = vrot.lane.b32.xlu0 %v932, 96
    %v1152 = vpop.permute.xlu0 %1151
    %1153 = vrot.lane.b32.xlu0 %v935, 96
    %v1154 = vpop.permute.xlu0 %1153
    %1155 = vrot.lane.b32.xlu0 %v938, 96
    %v1156 = vpop.permute.xlu0 %1155
    %v1188 = vadd.f32 %v1033, %v1096
    %v1189 = vadd.f32 %v1034, %v1098
    %v1190 = vadd.f32 %v1035, %v1100
    %v1191 = vadd.f32 %v1036, %v1102
    %v1192 = vadd.f32 %v1037, %v1104
    %v1193 = vadd.f32 %v1038, %v1106
    %v1194 = vadd.f32 %v1039, %v1108
    %v1195 = vadd.f32 %v1040, %v1110
    %v1196 = vadd.f32 %v1041, %v1112
    %v1197 = vadd.f32 %v1042, %v1114
    %v1198 = vadd.f32 %v1043, %v1116
    %v1199 = vadd.f32 %v1044, %v1118
    %v1200 = vadd.f32 %v1045, %v1120
    %v1201 = vadd.f32 %v1046, %v1122
    %v1202 = vadd.f32 %v1047, %v1124
    %v1203 = vadd.f32 %v1048, %v1126
    %v1204 = vadd.f32 %v1049, %v1128
    %v1205 = vadd.f32 %v1050, %v1130
    %v1206 = vadd.f32 %v1051, %v1132
    %v1207 = vadd.f32 %v1052, %v1134
    %v1208 = vadd.f32 %v1053, %v1136
    %v1209 = vadd.f32 %v1054, %v1138
    %v1210 = vadd.f32 %v1055, %v1140
    %v1211 = vadd.f32 %v1056, %v1142
    %v1212 = vadd.f32 %v1057, %v1144
    %v1213 = vadd.f32 %v1058, %v1146
    %v1214 = vadd.f32 %v1059, %v1148
    %v1215 = vadd.f32 %v1060, %v1150
    %v1216 = vadd.f32 %v1061, %v1152
    %v1217 = vadd.f32 %v1062, %v1154
    %v1218 = vadd.f32 %v1063, %v1156
    %1219 = vst.msk [vmem:[%s6 + $0xfa] sm:$0xff] %vm93, %v1188
    %1220 = vst.msk [vmem:[%s6 + $0x102] sm:$0xff] %vm93, %v1189
    %1221 = vst.msk [vmem:[%s6 + $0x10a] sm:$0xff] %vm93, %v1190
    %1222 = vst.msk [vmem:[%s6 + $0x112] sm:$0xff] %vm93, %v1191
    %1223 = vst.msk [vmem:[%s6 + $0x11a] sm:$0xff] %vm93, %v1192
    %1224 = vst.msk [vmem:[%s6 + $0x122] sm:$0xff] %vm93, %v1193
    %1225 = vst.msk [vmem:[%s6 + $0x12a] sm:$0xff] %vm93, %v1194
    %1226 = vst.msk [vmem:[%s6 + $0x132] sm:$0xff] %vm93, %v1195
    %1227 = vst.msk [vmem:[%s6 + $0x13a] sm:$0xff] %vm93, %v1196
    %1228 = vst.msk [vmem:[%s6 + $0x142] sm:$0xff] %vm93, %v1197
    %1229 = vst.msk [vmem:[%s6 + $0x14a] sm:$0xff] %vm93, %v1198
    %1230 = vst.msk [vmem:[%s6 + $0x152] sm:$0xff] %vm93, %v1199
    %1231 = vst.msk [vmem:[%s6 + $0x15a] sm:$0xff] %vm93, %v1200
    %1232 = vst.msk [vmem:[%s6 + $0x162] sm:$0xff] %vm93, %v1201
    %1233 = vst.msk [vmem:[%s6 + $0x16a] sm:$0xff] %vm93, %v1202
    %1234 = vst.msk [vmem:[%s6 + $0x172] sm:$0xff] %vm93, %v1203
    %1235 = vst.msk [vmem:[%s6 + $0x17a] sm:$0xff] %vm93, %v1204
    %1236 = vst.msk [vmem:[%s6 + $0x182] sm:$0xff] %vm93, %v1205
    %1237 = vst.msk [vmem:[%s6 + $0x18a] sm:$0xff] %vm93, %v1206
    %1238 = vst.msk [vmem:[%s6 + $0x192] sm:$0xff] %vm93, %v1207
    %1239 = vst.msk [vmem:[%s6 + $0x19a] sm:$0xff] %vm93, %v1208
    %1240 = vst.msk [vmem:[%s6 + $0x1a2] sm:$0xff] %vm93, %v1209
    %1241 = vst.msk [vmem:[%s6 + $0x1aa] sm:$0xff] %vm93, %v1210
    %1242 = vst.msk [vmem:[%s6 + $0x1b2] sm:$0xff] %vm93, %v1211
    %1243 = vst.msk [vmem:[%s6 + $0x1ba] sm:$0xff] %vm93, %v1212
    %1244 = vst.msk [vmem:[%s6 + $0x1c2] sm:$0xff] %vm93, %v1213
    %1245 = vst.msk [vmem:[%s6 + $0x1ca] sm:$0xff] %vm93, %v1214
    %1246 = vst.msk [vmem:[%s6 + $0x1d2] sm:$0xff] %vm93, %v1215
    %1247 = vst.msk [vmem:[%s6 + $0x1da] sm:$0xff] %vm93, %v1216
    %1248 = vst.msk [vmem:[%s6 + $0x1e2] sm:$0xff] %vm93, %v1217
    %1249 = vst.msk [vmem:[%s6 + $0x1ea] sm:$0xff] %vm93, %v1218
    %v1250 = vld [vmem:[%s6] sm:$0xff]
    %v1251 = vld [vmem:[%s6 + $0x8] sm:$0xff]
    %v1252 = vld [vmem:[%s6 + $0x10] sm:$0xff]
    %v1253 = vld [vmem:[%s6 + $0x18] sm:$0xff]
    %v1254 = vld [vmem:[%s6 + $0x20] sm:$0xff]
    %v1255 = vld [vmem:[%s6 + $0x28] sm:$0xff]
    %v1256 = vld [vmem:[%s6 + $0x30] sm:$0xff]
    %v1257 = vld [vmem:[%s6 + $0x38] sm:$0xff]
    %v1258 = vld [vmem:[%s6 + $0x40] sm:$0xff]
    %v1259 = vld [vmem:[%s6 + $0x48] sm:$0xff]
    %v1260 = vld [vmem:[%s6 + $0x50] sm:$0xff]
    %v1261 = vld [vmem:[%s6 + $0x58] sm:$0xff]
    %v1262 = vld [vmem:[%s6 + $0x60] sm:$0xff]
    %v1263 = vld [vmem:[%s6 + $0x68] sm:$0xff]
    %v1264 = vld [vmem:[%s6 + $0x70] sm:$0xff]
    %v1265 = vld [vmem:[%s6 + $0x78] sm:$0xff]
    %v1266 = vld [vmem:[%s6 + $0x80] sm:$0xff]
    %v1267 = vld [vmem:[%s6 + $0x88] sm:$0xff]
    %v1268 = vld [vmem:[%s6 + $0x90] sm:$0xff]
    %v1269 = vld [vmem:[%s6 + $0x98] sm:$0xff]
    %v1270 = vld [vmem:[%s6 + $0xa0] sm:$0xff]
    %v1271 = vld [vmem:[%s6 + $0xa8] sm:$0xff]
    %v1272 = vld [vmem:[%s6 + $0xb0] sm:$0xff]
    %v1273 = vld [vmem:[%s6 + $0xb8] sm:$0xff]
    %v1274 = vld [vmem:[%s6 + $0xc0] sm:$0xff]
    %v1275 = vld [vmem:[%s6 + $0xc8] sm:$0xff]
    %v1276 = vld [vmem:[%s6 + $0xd0] sm:$0xff]
    %v1277 = vld [vmem:[%s6 + $0xd8] sm:$0xff]
    %v1278 = vld [vmem:[%s6 + $0xe0] sm:$0xff]
    %v1279 = vld [vmem:[%s6 + $0xe8] sm:$0xff]
    %v1280 = vld [vmem:[%s6 + $0xf0] sm:$0xff]
    %v1281 = vld [vmem:[%s6 + $0xf8] sm:$0xff]
    %v1282 = vld [vmem:[%s6 + $0x100] sm:$0xff]
    %v1283 = vld [vmem:[%s6 + $0x108] sm:$0xff]
    %v1284 = vld [vmem:[%s6 + $0x110] sm:$0xff]
    %v1285 = vld [vmem:[%s6 + $0x118] sm:$0xff]
    %v1286 = vld [vmem:[%s6 + $0x120] sm:$0xff]
    %v1287 = vld [vmem:[%s6 + $0x128] sm:$0xff]
    %v1288 = vld [vmem:[%s6 + $0x130] sm:$0xff]
    %v1289 = vld [vmem:[%s6 + $0x138] sm:$0xff]
    %v1290 = vld [vmem:[%s6 + $0x140] sm:$0xff]
    %v1291 = vld [vmem:[%s6 + $0x148] sm:$0xff]
    %v1292 = vld [vmem:[%s6 + $0x150] sm:$0xff]
    %v1293 = vld [vmem:[%s6 + $0x158] sm:$0xff]
    %v1294 = vld [vmem:[%s6 + $0x160] sm:$0xff]
    %v1295 = vld [vmem:[%s6 + $0x168] sm:$0xff]
    %v1296 = vld [vmem:[%s6 + $0x170] sm:$0xff]
    %v1297 = vld [vmem:[%s6 + $0x178] sm:$0xff]
    %v1298 = vld [vmem:[%s6 + $0x180] sm:$0xff]
    %v1299 = vld [vmem:[%s6 + $0x188] sm:$0xff]
    %v1300 = vld [vmem:[%s6 + $0x190] sm:$0xff]
    %v1301 = vld [vmem:[%s6 + $0x198] sm:$0xff]
    %v1302 = vld [vmem:[%s6 + $0x1a0] sm:$0xff]
    %v1303 = vld [vmem:[%s6 + $0x1a8] sm:$0xff]
    %v1304 = vld [vmem:[%s6 + $0x1b0] sm:$0xff]
    %v1305 = vld [vmem:[%s6 + $0x1b8] sm:$0xff]
    %v1306 = vld [vmem:[%s6 + $0x1c0] sm:$0xff]
    %v1307 = vld [vmem:[%s6 + $0x1c8] sm:$0xff]
    %v1308 = vld [vmem:[%s6 + $0x1d0] sm:$0xff]
    %v1309 = vld [vmem:[%s6 + $0x1d8] sm:$0xff]
    %v1310 = vld [vmem:[%s6 + $0x1e0] sm:$0xff]
    %v1311 = vld [vmem:[%s6 + $0x1e8] sm:$0xff]
    %v1312 = vld [vmem:[%s6 + $0x1f0] sm:$0x3]
    %v1313 = vld [vmem:[#allocation4] sm:$0x1]
    %v1315 = vperm.slane %v1313, 0
    %v1317 = vadd.f32 %v1250, %v1315
    %v1318 = vadd.f32 %v1251, %v1315
    %v1319 = vadd.f32 %v1252, %v1315
    %v1320 = vadd.f32 %v1253, %v1315
    %v1321 = vadd.f32 %v1254, %v1315
    %v1322 = vadd.f32 %v1255, %v1315
    %v1323 = vadd.f32 %v1256, %v1315
    %v1324 = vadd.f32 %v1257, %v1315
    %v1325 = vadd.f32 %v1258, %v1315
    %v1326 = vadd.f32 %v1259, %v1315
    %v1327 = vadd.f32 %v1260, %v1315
    %v1328 = vadd.f32 %v1261, %v1315
    %v1329 = vadd.f32 %v1262, %v1315
    %v1330 = vadd.f32 %v1263, %v1315
    %v1331 = vadd.f32 %v1264, %v1315
    %v1332 = vadd.f32 %v1265, %v1315
    %v1333 = vadd.f32 %v1266, %v1315
    %v1334 = vadd.f32 %v1267, %v1315
    %v1335 = vadd.f32 %v1268, %v1315
    %v1336 = vadd.f32 %v1269, %v1315
    %v1337 = vadd.f32 %v1270, %v1315
    %v1338 = vadd.f32 %v1271, %v1315
    %v1339 = vadd.f32 %v1272, %v1315
    %v1340 = vadd.f32 %v1273, %v1315
    %v1341 = vadd.f32 %v1274, %v1315
    %v1342 = vadd.f32 %v1275, %v1315
    %v1343 = vadd.f32 %v1276, %v1315
    %v1344 = vadd.f32 %v1277, %v1315
    %v1345 = vadd.f32 %v1278, %v1315
    %v1346 = vadd.f32 %v1279, %v1315
    %v1347 = vadd.f32 %v1280, %v1315
    %v1348 = vadd.f32 %v1281, %v1315
    %v1349 = vadd.f32 %v1282, %v1315
    %v1350 = vadd.f32 %v1283, %v1315
    %v1351 = vadd.f32 %v1284, %v1315
    %v1352 = vadd.f32 %v1285, %v1315
    %v1353 = vadd.f32 %v1286, %v1315
    %v1354 = vadd.f32 %v1287, %v1315
    %v1355 = vadd.f32 %v1288, %v1315
    %v1356 = vadd.f32 %v1289, %v1315
    %v1357 = vadd.f32 %v1290, %v1315
    %v1358 = vadd.f32 %v1291, %v1315
    %v1359 = vadd.f32 %v1292, %v1315
    %v1360 = vadd.f32 %v1293, %v1315
    %v1361 = vadd.f32 %v1294, %v1315
    %v1362 = vadd.f32 %v1295, %v1315
    %v1363 = vadd.f32 %v1296, %v1315
    %v1364 = vadd.f32 %v1297, %v1315
    %v1365 = vadd.f32 %v1298, %v1315
    %v1366 = vadd.f32 %v1299, %v1315
    %v1367 = vadd.f32 %v1300, %v1315
    %v1368 = vadd.f32 %v1301, %v1315
    %v1369 = vadd.f32 %v1302, %v1315
    %v1370 = vadd.f32 %v1303, %v1315
    %v1371 = vadd.f32 %v1304, %v1315
    %v1372 = vadd.f32 %v1305, %v1315
    %v1373 = vadd.f32 %v1306, %v1315
    %v1374 = vadd.f32 %v1307, %v1315
    %v1375 = vadd.f32 %v1308, %v1315
    %v1376 = vadd.f32 %v1309, %v1315
    %v1377 = vadd.f32 %v1310, %v1315
    %v1378 = vadd.f32 %v1311, %v1315
    %v1379 = vadd.f32 %v1312, %v1315
    %v1380 = vsel %vm93, %v1317, 0.0
    %v1381 = vsel %vm93, %v1318, 0.0
    %v1382 = vadd.f32 %v1380, %v1381
    %v1383 = vsel %vm93, %v1319, 0.0
    %v1384 = vadd.f32 %v1382, %v1383
    %v1385 = vsel %vm93, %v1320, 0.0
    %v1386 = vadd.f32 %v1384, %v1385
    %v1387 = vsel %vm93, %v1321, 0.0
    %v1388 = vadd.f32 %v1386, %v1387
    %v1389 = vsel %vm93, %v1322, 0.0
    %v1390 = vadd.f32 %v1388, %v1389
    %v1391 = vsel %vm93, %v1323, 0.0
    %v1392 = vadd.f32 %v1390, %v1391
    %v1393 = vsel %vm93, %v1324, 0.0
    %v1394 = vadd.f32 %v1392, %v1393
    %v1395 = vsel %vm93, %v1325, 0.0
    %v1396 = vadd.f32 %v1394, %v1395
    %v1397 = vsel %vm93, %v1326, 0.0
    %v1398 = vadd.f32 %v1396, %v1397
    %v1399 = vsel %vm93, %v1327, 0.0
    %v1400 = vadd.f32 %v1398, %v1399
    %v1401 = vsel %vm93, %v1328, 0.0
    %v1402 = vadd.f32 %v1400, %v1401
    %v1403 = vsel %vm93, %v1329, 0.0
    %v1404 = vadd.f32 %v1402, %v1403
    %v1405 = vsel %vm93, %v1330, 0.0
    %v1406 = vadd.f32 %v1404, %v1405
    %v1407 = vsel %vm93, %v1331, 0.0
    %v1408 = vadd.f32 %v1406, %v1407
    %v1409 = vsel %vm93, %v1332, 0.0
    %v1410 = vadd.f32 %v1408, %v1409
    %v1411 = vsel %vm93, %v1333, 0.0
    %v1412 = vadd.f32 %v1410, %v1411
    %v1413 = vsel %vm93, %v1334, 0.0
    %v1414 = vadd.f32 %v1412, %v1413
    %v1415 = vsel %vm93, %v1335, 0.0
    %v1416 = vadd.f32 %v1414, %v1415
    %v1417 = vsel %vm93, %v1336, 0.0
    %v1418 = vadd.f32 %v1416, %v1417
    %v1419 = vsel %vm93, %v1337, 0.0
    %v1420 = vadd.f32 %v1418, %v1419
    %v1421 = vsel %vm93, %v1338, 0.0
    %v1422 = vadd.f32 %v1420, %v1421
    %v1423 = vsel %vm93, %v1339, 0.0
    %v1424 = vadd.f32 %v1422, %v1423
    %v1425 = vsel %vm93, %v1340, 0.0
    %v1426 = vadd.f32 %v1424, %v1425
    %v1427 = vsel %vm93, %v1341, 0.0
    %v1428 = vadd.f32 %v1426, %v1427
    %v1429 = vsel %vm93, %v1342, 0.0
    %v1430 = vadd.f32 %v1428, %v1429
    %v1431 = vsel %vm93, %v1343, 0.0
    %v1432 = vadd.f32 %v1430, %v1431
    %v1433 = vsel %vm93, %v1344, 0.0
    %v1434 = vadd.f32 %v1432, %v1433
    %v1435 = vsel %vm93, %v1345, 0.0
    %v1436 = vadd.f32 %v1434, %v1435
    %v1437 = vsel %vm93, %v1346, 0.0
    %v1438 = vadd.f32 %v1436, %v1437
    %v1439 = vsel %vm93, %v1347, 0.0
    %v1440 = vadd.f32 %v1438, %v1439
    %v1441 = vsel %vm93, %v1348, 0.0
    %v1442 = vadd.f32 %v1440, %v1441
    %v1443 = vsel %vm93, %v1349, 0.0
    %v1444 = vadd.f32 %v1442, %v1443
    %v1445 = vsel %vm93, %v1350, 0.0
    %v1446 = vadd.f32 %v1444, %v1445
    %v1447 = vsel %vm93, %v1351, 0.0
    %v1448 = vadd.f32 %v1446, %v1447
    %v1449 = vsel %vm93, %v1352, 0.0
    %v1450 = vadd.f32 %v1448, %v1449
    %v1451 = vsel %vm93, %v1353, 0.0
    %v1452 = vadd.f32 %v1450, %v1451
    %v1453 = vsel %vm93, %v1354, 0.0
    %v1454 = vadd.f32 %v1452, %v1453
    %v1455 = vsel %vm93, %v1355, 0.0
    %v1456 = vadd.f32 %v1454, %v1455
    %v1457 = vsel %vm93, %v1356, 0.0
    %v1458 = vadd.f32 %v1456, %v1457
    %v1459 = vsel %vm93, %v1357, 0.0
    %v1460 = vadd.f32 %v1458, %v1459
    %v1461 = vsel %vm93, %v1358, 0.0
    %v1462 = vadd.f32 %v1460, %v1461
    %v1463 = vsel %vm93, %v1359, 0.0
    %v1464 = vadd.f32 %v1462, %v1463
    %v1465 = vsel %vm93, %v1360, 0.0
    %v1466 = vadd.f32 %v1464, %v1465
    %v1467 = vsel %vm93, %v1361, 0.0
    %v1468 = vadd.f32 %v1466, %v1467
    %v1469 = vsel %vm93, %v1362, 0.0
    %v1470 = vadd.f32 %v1468, %v1469
    %v1471 = vsel %vm93, %v1363, 0.0
    %v1472 = vadd.f32 %v1470, %v1471
    %v1473 = vsel %vm93, %v1364, 0.0
    %v1474 = vadd.f32 %v1472, %v1473
    %v1475 = vsel %vm93, %v1365, 0.0
    %v1476 = vadd.f32 %v1474, %v1475
    %v1477 = vsel %vm93, %v1366, 0.0
    %v1478 = vadd.f32 %v1476, %v1477
    %v1479 = vsel %vm93, %v1367, 0.0
    %v1480 = vadd.f32 %v1478, %v1479
    %v1481 = vsel %vm93, %v1368, 0.0
    %v1482 = vadd.f32 %v1480, %v1481
    %v1483 = vsel %vm93, %v1369, 0.0
    %v1484 = vadd.f32 %v1482, %v1483
    %v1485 = vsel %vm93, %v1370, 0.0
    %v1486 = vadd.f32 %v1484, %v1485
    %v1487 = vsel %vm93, %v1371, 0.0
    %v1488 = vadd.f32 %v1486, %v1487
    %v1489 = vsel %vm93, %v1372, 0.0
    %v1490 = vadd.f32 %v1488, %v1489
    %v1491 = vsel %vm93, %v1373, 0.0
    %v1492 = vadd.f32 %v1490, %v1491
    %v1493 = vsel %vm93, %v1374, 0.0
    %v1494 = vadd.f32 %v1492, %v1493
    %v1495 = vsel %vm93, %v1375, 0.0
    %v1496 = vadd.f32 %v1494, %v1495
    %v1497 = vsel %vm93, %v1376, 0.0
    %v1498 = vadd.f32 %v1496, %v1497
    %v1499 = vsel %vm93, %v1377, 0.0
    %v1500 = vadd.f32 %v1498, %v1499
    %v1501 = vsel %vm93, %v1378, 0.0
    %v1502 = vadd.f32 %v1500, %v1501
    %v1503 = vsel %vm156, %v1379, 0.0
    %v1504 = vadd.f32 %v1502, %v1503
    %v1505 = vrot.slane %v1504, 4
    %v1506 = vadd.f32 %v1504, %v1505
    %v1507 = vrot.slane %v1506, 2
    %v1508 = vadd.f32 %v1506, %v1507
    %v1509 = vrot.slane %v1508, 1
    %v1510 = vadd.f32 %v1508, %v1509
    %v1511 = vmul.f32 %v1317, %v1317
    %v1512 = vmul.f32 %v1318, %v1318
    %v1513 = vmul.f32 %v1319, %v1319
    %v1514 = vmul.f32 %v1320, %v1320
    %v1515 = vmul.f32 %v1321, %v1321
    %v1516 = vmul.f32 %v1322, %v1322
    %v1517 = vmul.f32 %v1323, %v1323
    %v1518 = vmul.f32 %v1324, %v1324
    %v1519 = vmul.f32 %v1325, %v1325
    %v1520 = vmul.f32 %v1326, %v1326
    %v1521 = vmul.f32 %v1327, %v1327
    %v1522 = vmul.f32 %v1328, %v1328
    %v1523 = vmul.f32 %v1329, %v1329
    %v1524 = vmul.f32 %v1330, %v1330
    %v1525 = vmul.f32 %v1331, %v1331
    %v1526 = vmul.f32 %v1332, %v1332
    %v1527 = vmul.f32 %v1333, %v1333
    %v1528 = vmul.f32 %v1334, %v1334
    %v1529 = vmul.f32 %v1335, %v1335
    %v1530 = vmul.f32 %v1336, %v1336
    %v1531 = vmul.f32 %v1337, %v1337
    %v1532 = vmul.f32 %v1338, %v1338
    %v1533 = vmul.f32 %v1339, %v1339
    %v1534 = vmul.f32 %v1340, %v1340
    %v1535 = vmul.f32 %v1341, %v1341
    %v1536 = vmul.f32 %v1342, %v1342
    %v1537 = vmul.f32 %v1343, %v1343
    %v1538 = vmul.f32 %v1344, %v1344
    %v1539 = vmul.f32 %v1345, %v1345
    %v1540 = vmul.f32 %v1346, %v1346
    %v1541 = vmul.f32 %v1347, %v1347
    %v1542 = vmul.f32 %v1348, %v1348
    %v1543 = vmul.f32 %v1349, %v1349
    %v1544 = vmul.f32 %v1350, %v1350
    %v1545 = vmul.f32 %v1351, %v1351
    %v1546 = vmul.f32 %v1352, %v1352
    %v1547 = vmul.f32 %v1353, %v1353
    %v1548 = vmul.f32 %v1354, %v1354
    %v1549 = vmul.f32 %v1355, %v1355
    %v1550 = vmul.f32 %v1356, %v1356
    %v1551 = vmul.f32 %v1357, %v1357
    %v1552 = vmul.f32 %v1358, %v1358
    %v1553 = vmul.f32 %v1359, %v1359
    %v1554 = vmul.f32 %v1360, %v1360
    %v1555 = vmul.f32 %v1361, %v1361
    %v1556 = vmul.f32 %v1362, %v1362
    %v1557 = vmul.f32 %v1363, %v1363
    %v1558 = vmul.f32 %v1364, %v1364
    %v1559 = vmul.f32 %v1365, %v1365
    %v1560 = vmul.f32 %v1366, %v1366
    %v1561 = vmul.f32 %v1367, %v1367
    %v1562 = vmul.f32 %v1368, %v1368
    %v1563 = vmul.f32 %v1369, %v1369
    %v1564 = vmul.f32 %v1370, %v1370
    %v1565 = vmul.f32 %v1371, %v1371
    %v1566 = vmul.f32 %v1372, %v1372
    %v1567 = vmul.f32 %v1373, %v1373
    %v1568 = vmul.f32 %v1374, %v1374
    %v1569 = vmul.f32 %v1375, %v1375
    %v1570 = vmul.f32 %v1376, %v1376
    %v1571 = vmul.f32 %v1377, %v1377
    %v1572 = vmul.f32 %v1378, %v1378
    %v1573 = vmul.f32 %v1379, %v1379
    %v1574 = vsel %vm93, %v1511, 0.0
    %v1575 = vsel %vm93, %v1512, 0.0
    %v1576 = vadd.f32 %v1574, %v1575
    %v1577 = vsel %vm93, %v1513, 0.0
    %v1578 = vadd.f32 %v1576, %v1577
    %v1579 = vsel %vm93, %v1514, 0.0
    %v1580 = vadd.f32 %v1578, %v1579
    %v1581 = vsel %vm93, %v1515, 0.0
    %v1582 = vadd.f32 %v1580, %v1581
    %v1583 = vsel %vm93, %v1516, 0.0
    %v1584 = vadd.f32 %v1582, %v1583
    %v1585 = vsel %vm93, %v1517, 0.0
    %v1586 = vadd.f32 %v1584, %v1585
    %v1587 = vsel %vm93, %v1518, 0.0
    %v1588 = vadd.f32 %v1586, %v1587
    %v1589 = vsel %vm93, %v1519, 0.0
    %v1590 = vadd.f32 %v1588, %v1589
    %v1591 = vsel %vm93, %v1520, 0.0
    %v1592 = vadd.f32 %v1590, %v1591
    %v1593 = vsel %vm93, %v1521, 0.0
    %v1594 = vadd.f32 %v1592, %v1593
    %v1595 = vsel %vm93, %v1522, 0.0
    %v1596 = vadd.f32 %v1594, %v1595
    %v1597 = vsel %vm93, %v1523, 0.0
    %v1598 = vadd.f32 %v1596, %v1597
    %v1599 = vsel %vm93, %v1524, 0.0
    %v1600 = vadd.f32 %v1598, %v1599
    %v1601 = vsel %vm93, %v1525, 0.0
    %v1602 = vadd.f32 %v1600, %v1601
    %v1603 = vsel %vm93, %v1526, 0.0
    %v1604 = vadd.f32 %v1602, %v1603
    %v1605 = vsel %vm93, %v1527, 0.0
    %v1606 = vadd.f32 %v1604, %v1605
    %v1607 = vsel %vm93, %v1528, 0.0
    %v1608 = vadd.f32 %v1606, %v1607
    %v1609 = vsel %vm93, %v1529, 0.0
    %v1610 = vadd.f32 %v1608, %v1609
    %v1611 = vsel %vm93, %v1530, 0.0
    %v1612 = vadd.f32 %v1610, %v1611
    %v1613 = vsel %vm93, %v1531, 0.0
    %v1614 = vadd.f32 %v1612, %v1613
    %v1615 = vsel %vm93, %v1532, 0.0
    %v1616 = vadd.f32 %v1614, %v1615
    %v1617 = vsel %vm93, %v1533, 0.0
    %v1618 = vadd.f32 %v1616, %v1617
    %v1619 = vsel %vm93, %v1534, 0.0
    %v1620 = vadd.f32 %v1618, %v1619
    %v1621 = vsel %vm93, %v1535, 0.0
    %v1622 = vadd.f32 %v1620, %v1621
    %v1623 = vsel %vm93, %v1536, 0.0
    %v1624 = vadd.f32 %v1622, %v1623
    %v1625 = vsel %vm93, %v1537, 0.0
    %v1626 = vadd.f32 %v1624, %v1625
    %v1627 = vsel %vm93, %v1538, 0.0
    %v1628 = vadd.f32 %v1626, %v1627
    %v1629 = vsel %vm93, %v1539, 0.0
    %v1630 = vadd.f32 %v1628, %v1629
    %v1631 = vsel %vm93, %v1540, 0.0
    %v1632 = vadd.f32 %v1630, %v1631
    %v1633 = vsel %vm93, %v1541, 0.0
    %v1634 = vadd.f32 %v1632, %v1633
    %v1635 = vsel %vm93, %v1542, 0.0
    %v1636 = vadd.f32 %v1634, %v1635
    %v1637 = vsel %vm93, %v1543, 0.0
    %v1638 = vadd.f32 %v1636, %v1637
    %v1639 = vsel %vm93, %v1544, 0.0
    %v1640 = vadd.f32 %v1638, %v1639
    %v1641 = vsel %vm93, %v1545, 0.0
    %v1642 = vadd.f32 %v1640, %v1641
    %v1643 = vsel %vm93, %v1546, 0.0
    %v1644 = vadd.f32 %v1642, %v1643
    %v1645 = vsel %vm93, %v1547, 0.0
    %v1646 = vadd.f32 %v1644, %v1645
    %v1647 = vsel %vm93, %v1548, 0.0
    %v1648 = vadd.f32 %v1646, %v1647
    %v1649 = vsel %vm93, %v1549, 0.0
    %v1650 = vadd.f32 %v1648, %v1649
    %v1651 = vsel %vm93, %v1550, 0.0
    %v1652 = vadd.f32 %v1650, %v1651
    %v1653 = vsel %vm93, %v1551, 0.0
    %v1654 = vadd.f32 %v1652, %v1653
    %v1655 = vsel %vm93, %v1552, 0.0
    %v1656 = vadd.f32 %v1654, %v1655
    %v1657 = vsel %vm93, %v1553, 0.0
    %v1658 = vadd.f32 %v1656, %v1657
    %v1659 = vsel %vm93, %v1554, 0.0
    %v1660 = vadd.f32 %v1658, %v1659
    %v1661 = vsel %vm93, %v1555, 0.0
    %v1662 = vadd.f32 %v1660, %v1661
    %v1663 = vsel %vm93, %v1556, 0.0
    %v1664 = vadd.f32 %v1662, %v1663
    %v1665 = vsel %vm93, %v1557, 0.0
    %v1666 = vadd.f32 %v1664, %v1665
    %v1667 = vsel %vm93, %v1558, 0.0
    %v1668 = vadd.f32 %v1666, %v1667
    %v1669 = vsel %vm93, %v1559, 0.0
    %v1670 = vadd.f32 %v1668, %v1669
    %v1671 = vsel %vm93, %v1560, 0.0
    %v1672 = vadd.f32 %v1670, %v1671
    %v1673 = vsel %vm93, %v1561, 0.0
    %v1674 = vadd.f32 %v1672, %v1673
    %v1675 = vsel %vm93, %v1562, 0.0
    %v1676 = vadd.f32 %v1674, %v1675
    %v1677 = vsel %vm93, %v1563, 0.0
    %v1678 = vadd.f32 %v1676, %v1677
    %v1679 = vsel %vm93, %v1564, 0.0
    %v1680 = vadd.f32 %v1678, %v1679
    %v1681 = vsel %vm93, %v1565, 0.0
    %v1682 = vadd.f32 %v1680, %v1681
    %v1683 = vsel %vm93, %v1566, 0.0
    %v1684 = vadd.f32 %v1682, %v1683
    %v1685 = vsel %vm93, %v1567, 0.0
    %v1686 = vadd.f32 %v1684, %v1685
    %v1687 = vsel %vm93, %v1568, 0.0
    %v1688 = vadd.f32 %v1686, %v1687
    %v1689 = vsel %vm93, %v1569, 0.0
    %v1690 = vadd.f32 %v1688, %v1689
    %v1691 = vsel %vm93, %v1570, 0.0
    %v1692 = vadd.f32 %v1690, %v1691
    %v1693 = vsel %vm93, %v1571, 0.0
    %v1694 = vadd.f32 %v1692, %v1693
    %v1695 = vsel %vm93, %v1572, 0.0
    %v1696 = vadd.f32 %v1694, %v1695
    %v1697 = vsel %vm156, %v1573, 0.0
    %v1698 = vadd.f32 %v1696, %v1697
    %v1699 = vrot.slane %v1698, 4
    %v1700 = vadd.f32 %v1698, %v1699
    %v1701 = vrot.slane %v1700, 2
    %v1702 = vadd.f32 %v1700, %v1701
    %v1703 = vrot.slane %v1702, 1
    %v1704 = vadd.f32 %v1702, %v1703
    %v1705 = vld [vmem:[#allocation6] sm:$0xff]
    %v1706 = vld [vmem:[#allocation6 + $0x8] sm:$0xff]
    %v1707 = vld [vmem:[#allocation6 + $0x10] sm:$0xff]
    %v1708 = vld [vmem:[#allocation6 + $0x18] sm:$0xff]
    %v1710 = vsel %vm93, %v1510, 0
    %1712 = vmatpush.msra.mxu0 0.0
    %1713 = vmatpush.msra.mxu0 0.0
    %1714 = vmatpush.msra.mxu0 0.0
    %1715 = vmatpush.msra.mxu0 0.0
    %1716 = vmatpush.msra.mxu0 0.0
    %1717 = vmatpush.msra.mxu0 0.0
    %1718 = vmatpush.msra.mxu0 0.0
    %1719 = vmatpush.msra.mxu0 0.0
    %1720 = vmatpush.msra.mxu0 0.0
    %1721 = vmatpush.msra.mxu0 0.0
    %1722 = vmatpush.msra.mxu0 0.0
    %1723 = vmatpush.msra.mxu0 0.0
    %1724 = vmatpush.msra.mxu0 %v1708
    %1725 = vmatpush.msra.mxu0 %v1707
    %1726 = vmatpush.msra.mxu0 %v1706
    %1727 = vmatpush.msra.mxu0 %v1705
    %1728 = vmatmul.f32.gmra.mxu0 %v1710
    %v1729 = vpop.f32.mrf.mxu0
    %v1730 = vadd.f32 0.0, %v1729
    %1731 = vdwg.mxu0
    %v1732 = vmul.f32 %v1730, 0.000251004
    %v1734 = vsel %vm93, %v1704, 0
    %1736 = vmatpush.msra.mxu0 0.0
    %1737 = vmatpush.msra.mxu0 0.0
    %1738 = vmatpush.msra.mxu0 0.0
    %1739 = vmatpush.msra.mxu0 0.0
    %1740 = vmatpush.msra.mxu0 0.0
    %1741 = vmatpush.msra.mxu0 0.0
    %1742 = vmatpush.msra.mxu0 0.0
    %1743 = vmatpush.msra.mxu0 0.0
    %1744 = vmatpush.msra.mxu0 0.0
    %1745 = vmatpush.msra.mxu0 0.0
    %1746 = vmatpush.msra.mxu0 0.0
    %1747 = vmatpush.msra.mxu0 0.0
    %1748 = vmatpush.msra.mxu0 %v1708
    %1749 = vmatpush.msra.mxu0 %v1707
    %1750 = vmatpush.msra.mxu0 %v1706
    %1751 = vmatpush.msra.mxu0 %v1705
    %1752 = vmatmul.f32.gmra.mxu0 %v1734
    %v1753 = vpop.f32.mrf.mxu0
    %v1754 = vadd.f32 0.0, %v1753
    %1755 = vdwg.mxu0
    %v1756 = vmul.f32 %v1754, 0.000251004
    %v1757 = vmul.f32 %v1732, %v1732
    %v1758 = vsub.f32 %v1756, %v1757
    %v1759 = vadd.f32 %v1758, 1e-05
    %v1760 = vrsqrt.pop %v1759
    %v1761 = vmul.f32 %v1760, %v1759
    %v1762 = vmul.f32 %v1761, %v1760
    %v1763 = vmul.f32 0.5, %v1762
    %v1764 = vsub.f32 1.5, %v1763
    %v1765 = vmul.f32 %v1760, %v1764
    %vm1766 = vweird.f32 %v1759
    %vm1767 = vweird.f32 %v1760
    %vm1768 = vmor %vm1766, %vm1767
    %v1769 = vsel %vm1768, %v1760, %v1765
    %v1770 = vperm.slane %v1732, 0
    %v1771 = vsub.f32 %v1317, %v1770
    %v1772 = vsub.f32 %v1318, %v1770
    %v1773 = vsub.f32 %v1319, %v1770
    %v1774 = vsub.f32 %v1320, %v1770
    %v1775 = vsub.f32 %v1321, %v1770
    %v1776 = vsub.f32 %v1322, %v1770
    %v1777 = vsub.f32 %v1323, %v1770
    %v1778 = vsub.f32 %v1324, %v1770
    %v1779 = vsub.f32 %v1325, %v1770
    %v1780 = vsub.f32 %v1326, %v1770
    %v1781 = vsub.f32 %v1327, %v1770
    %v1782 = vsub.f32 %v1328, %v1770
    %v1783 = vsub.f32 %v1329, %v1770
    %v1784 = vsub.f32 %v1330, %v1770
    %v1785 = vsub.f32 %v1331, %v1770
    %v1786 = vsub.f32 %v1332, %v1770
    %v1787 = vsub.f32 %v1333, %v1770
    %v1788 = vsub.f32 %v1334, %v1770
    %v1789 = vsub.f32 %v1335, %v1770
    %v1790 = vsub.f32 %v1336, %v1770
    %v1791 = vsub.f32 %v1337, %v1770
    %v1792 = vsub.f32 %v1338, %v1770
    %v1793 = vsub.f32 %v1339, %v1770
    %v1794 = vsub.f32 %v1340, %v1770
    %v1795 = vsub.f32 %v1341, %v1770
    %v1796 = vsub.f32 %v1342, %v1770
    %v1797 = vsub.f32 %v1343, %v1770
    %v1798 = vsub.f32 %v1344, %v1770
    %v1799 = vsub.f32 %v1345, %v1770
    %v1800 = vsub.f32 %v1346, %v1770
    %v1801 = vsub.f32 %v1347, %v1770
    %v1802 = vsub.f32 %v1348, %v1770
    %v1803 = vsub.f32 %v1349, %v1770
    %v1804 = vsub.f32 %v1350, %v1770
    %v1805 = vsub.f32 %v1351, %v1770
    %v1806 = vsub.f32 %v1352, %v1770
    %v1807 = vsub.f32 %v1353, %v1770
    %v1808 = vsub.f32 %v1354, %v1770
    %v1809 = vsub.f32 %v1355, %v1770
    %v1810 = vsub.f32 %v1356, %v1770
    %v1811 = vsub.f32 %v1357, %v1770
    %v1812 = vsub.f32 %v1358, %v1770
    %v1813 = vsub.f32 %v1359, %v1770
    %v1814 = vsub.f32 %v1360, %v1770
    %v1815 = vsub.f32 %v1361, %v1770
    %v1816 = vsub.f32 %v1362, %v1770
    %v1817 = vsub.f32 %v1363, %v1770
    %v1818 = vsub.f32 %v1364, %v1770
    %v1819 = vsub.f32 %v1365, %v1770
    %v1820 = vsub.f32 %v1366, %v1770
    %v1821 = vsub.f32 %v1367, %v1770
    %v1822 = vsub.f32 %v1368, %v1770
    %v1823 = vsub.f32 %v1369, %v1770
    %v1824 = vsub.f32 %v1370, %v1770
    %v1825 = vsub.f32 %v1371, %v1770
    %v1826 = vsub.f32 %v1372, %v1770
    %v1827 = vsub.f32 %v1373, %v1770
    %v1828 = vsub.f32 %v1374, %v1770
    %v1829 = vsub.f32 %v1375, %v1770
    %v1830 = vsub.f32 %v1376, %v1770
    %v1831 = vsub.f32 %v1377, %v1770
    %v1832 = vsub.f32 %v1378, %v1770
    %v1833 = vsub.f32 %v1379, %v1770
    %v1834 = vld [vmem:[#allocation7] sm:$0x1]
    %v1835 = vmul.f32 %v1769, %v1834
    %v1836 = vperm.slane %v1835, 0
    %v1837 = vmul.f32 %v1771, %v1836
    %v1838 = vmul.f32 %v1772, %v1836
    %v1839 = vmul.f32 %v1773, %v1836
    %v1840 = vmul.f32 %v1774, %v1836
    %v1841 = vmul.f32 %v1775, %v1836
    %v1842 = vmul.f32 %v1776, %v1836
    %v1843 = vmul.f32 %v1777, %v1836
    %v1844 = vmul.f32 %v1778, %v1836
    %v1845 = vmul.f32 %v1779, %v1836
    %v1846 = vmul.f32 %v1780, %v1836
    %v1847 = vmul.f32 %v1781, %v1836
    %v1848 = vmul.f32 %v1782, %v1836
    %v1849 = vmul.f32 %v1783, %v1836
    %v1850 = vmul.f32 %v1784, %v1836
    %v1851 = vmul.f32 %v1785, %v1836
    %v1852 = vmul.f32 %v1786, %v1836
    %v1853 = vmul.f32 %v1787, %v1836
    %v1854 = vmul.f32 %v1788, %v1836
    %v1855 = vmul.f32 %v1789, %v1836
    %v1856 = vmul.f32 %v1790, %v1836
    %v1857 = vmul.f32 %v1791, %v1836
    %v1858 = vmul.f32 %v1792, %v1836
    %v1859 = vmul.f32 %v1793, %v1836
    %v1860 = vmul.f32 %v1794, %v1836
    %v1861 = vmul.f32 %v1795, %v1836
    %v1862 = vmul.f32 %v1796, %v1836
    %v1863 = vmul.f32 %v1797, %v1836
    %v1864 = vmul.f32 %v1798, %v1836
    %v1865 = vmul.f32 %v1799, %v1836
    %v1866 = vmul.f32 %v1800, %v1836
    %v1867 = vmul.f32 %v1801, %v1836
    %v1868 = vmul.f32 %v1802, %v1836
    %v1869 = vmul.f32 %v1803, %v1836
    %v1870 = vmul.f32 %v1804, %v1836
    %v1871 = vmul.f32 %v1805, %v1836
    %v1872 = vmul.f32 %v1806, %v1836
    %v1873 = vmul.f32 %v1807, %v1836
    %v1874 = vmul.f32 %v1808, %v1836
    %v1875 = vmul.f32 %v1809, %v1836
    %v1876 = vmul.f32 %v1810, %v1836
    %v1877 = vmul.f32 %v1811, %v1836
    %v1878 = vmul.f32 %v1812, %v1836
    %v1879 = vmul.f32 %v1813, %v1836
    %v1880 = vmul.f32 %v1814, %v1836
    %v1881 = vmul.f32 %v1815, %v1836
    %v1882 = vmul.f32 %v1816, %v1836
    %v1883 = vmul.f32 %v1817, %v1836
    %v1884 = vmul.f32 %v1818, %v1836
    %v1885 = vmul.f32 %v1819, %v1836
    %v1886 = vmul.f32 %v1820, %v1836
    %v1887 = vmul.f32 %v1821, %v1836
    %v1888 = vmul.f32 %v1822, %v1836
    %v1889 = vmul.f32 %v1823, %v1836
    %v1890 = vmul.f32 %v1824, %v1836
    %v1891 = vmul.f32 %v1825, %v1836
    %v1892 = vmul.f32 %v1826, %v1836
    %v1893 = vmul.f32 %v1827, %v1836
    %v1894 = vmul.f32 %v1828, %v1836
    %v1895 = vmul.f32 %v1829, %v1836
    %v1896 = vmul.f32 %v1830, %v1836
    %v1897 = vmul.f32 %v1831, %v1836
    %v1898 = vmul.f32 %v1832, %v1836
    %v1899 = vmul.f32 %v1833, %v1836
    %v1900 = vld [vmem:[#allocation9] sm:$0x1]
    %v1902 = vperm.slane %v1900, 0
    %v1904 = vadd.f32 %v1837, %v1902
    %v1905 = vadd.f32 %v1838, %v1902
    %v1906 = vadd.f32 %v1839, %v1902
    %v1907 = vadd.f32 %v1840, %v1902
    %v1908 = vadd.f32 %v1841, %v1902
    %v1909 = vadd.f32 %v1842, %v1902
    %v1910 = vadd.f32 %v1843, %v1902
    %v1911 = vadd.f32 %v1844, %v1902
    %v1912 = vadd.f32 %v1845, %v1902
    %v1913 = vadd.f32 %v1846, %v1902
    %v1914 = vadd.f32 %v1847, %v1902
    %v1915 = vadd.f32 %v1848, %v1902
    %v1916 = vadd.f32 %v1849, %v1902
    %v1917 = vadd.f32 %v1850, %v1902
    %v1918 = vadd.f32 %v1851, %v1902
    %v1919 = vadd.f32 %v1852, %v1902
    %v1920 = vadd.f32 %v1853, %v1902
    %v1921 = vadd.f32 %v1854, %v1902
    %v1922 = vadd.f32 %v1855, %v1902
    %v1923 = vadd.f32 %v1856, %v1902
    %v1924 = vadd.f32 %v1857, %v1902
    %v1925 = vadd.f32 %v1858, %v1902
    %v1926 = vadd.f32 %v1859, %v1902
    %v1927 = vadd.f32 %v1860, %v1902
    %v1928 = vadd.f32 %v1861, %v1902
    %v1929 = vadd.f32 %v1862, %v1902
    %v1930 = vadd.f32 %v1863, %v1902
    %v1931 = vadd.f32 %v1864, %v1902
    %v1932 = vadd.f32 %v1865, %v1902
    %v1933 = vadd.f32 %v1866, %v1902
    %v1934 = vadd.f32 %v1867, %v1902
    %v1935 = vadd.f32 %v1868, %v1902
    %v1936 = vadd.f32 %v1869, %v1902
    %v1937 = vadd.f32 %v1870, %v1902
    %v1938 = vadd.f32 %v1871, %v1902
    %v1939 = vadd.f32 %v1872, %v1902
    %v1940 = vadd.f32 %v1873, %v1902
    %v1941 = vadd.f32 %v1874, %v1902
    %v1942 = vadd.f32 %v1875, %v1902
    %v1943 = vadd.f32 %v1876, %v1902
    %v1944 = vadd.f32 %v1877, %v1902
    %v1945 = vadd.f32 %v1878, %v1902
    %v1946 = vadd.f32 %v1879, %v1902
    %v1947 = vadd.f32 %v1880, %v1902
    %v1948 = vadd.f32 %v1881, %v1902
    %v1949 = vadd.f32 %v1882, %v1902
    %v1950 = vadd.f32 %v1883, %v1902
    %v1951 = vadd.f32 %v1884, %v1902
    %v1952 = vadd.f32 %v1885, %v1902
    %v1953 = vadd.f32 %v1886, %v1902
    %v1954 = vadd.f32 %v1887, %v1902
    %v1955 = vadd.f32 %v1888, %v1902
    %v1956 = vadd.f32 %v1889, %v1902
    %v1957 = vadd.f32 %v1890, %v1902
    %v1958 = vadd.f32 %v1891, %v1902
    %v1959 = vadd.f32 %v1892, %v1902
    %v1960 = vadd.f32 %v1893, %v1902
    %v1961 = vadd.f32 %v1894, %v1902
    %v1962 = vadd.f32 %v1895, %v1902
    %v1963 = vadd.f32 %v1896, %v1902
    %v1964 = vadd.f32 %v1897, %v1902
    %v1965 = vadd.f32 %v1898, %v1902
    %v1966 = vadd.f32 %v1899, %v1902
    %1967 = vst.msk [vmem:[%s6] sm:$0xff] %vm93, %v1904
    %1968 = vst.msk [vmem:[%s6 + $0x8] sm:$0xff] %vm93, %v1905
    %1969 = vst.msk [vmem:[%s6 + $0x10] sm:$0xff] %vm93, %v1906
    %1970 = vst.msk [vmem:[%s6 + $0x18] sm:$0xff] %vm93, %v1907
    %1971 = vst.msk [vmem:[%s6 + $0x20] sm:$0xff] %vm93, %v1908
    %1972 = vst.msk [vmem:[%s6 + $0x28] sm:$0xff] %vm93, %v1909
    %1973 = vst.msk [vmem:[%s6 + $0x30] sm:$0xff] %vm93, %v1910
    %1974 = vst.msk [vmem:[%s6 + $0x38] sm:$0xff] %vm93, %v1911
    %1975 = vst.msk [vmem:[%s6 + $0x40] sm:$0xff] %vm93, %v1912
    %1976 = vst.msk [vmem:[%s6 + $0x48] sm:$0xff] %vm93, %v1913
    %1977 = vst.msk [vmem:[%s6 + $0x50] sm:$0xff] %vm93, %v1914
    %1978 = vst.msk [vmem:[%s6 + $0x58] sm:$0xff] %vm93, %v1915
    %1979 = vst.msk [vmem:[%s6 + $0x60] sm:$0xff] %vm93, %v1916
    %1980 = vst.msk [vmem:[%s6 + $0x68] sm:$0xff] %vm93, %v1917
    %1981 = vst.msk [vmem:[%s6 + $0x70] sm:$0xff] %vm93, %v1918
    %1982 = vst.msk [vmem:[%s6 + $0x78] sm:$0xff] %vm93, %v1919
    %1983 = vst.msk [vmem:[%s6 + $0x80] sm:$0xff] %vm93, %v1920
    %1984 = vst.msk [vmem:[%s6 + $0x88] sm:$0xff] %vm93, %v1921
    %1985 = vst.msk [vmem:[%s6 + $0x90] sm:$0xff] %vm93, %v1922
    %1986 = vst.msk [vmem:[%s6 + $0x98] sm:$0xff] %vm93, %v1923
    %1987 = vst.msk [vmem:[%s6 + $0xa0] sm:$0xff] %vm93, %v1924
    %1988 = vst.msk [vmem:[%s6 + $0xa8] sm:$0xff] %vm93, %v1925
    %1989 = vst.msk [vmem:[%s6 + $0xb0] sm:$0xff] %vm93, %v1926
    %1990 = vst.msk [vmem:[%s6 + $0xb8] sm:$0xff] %vm93, %v1927
    %1991 = vst.msk [vmem:[%s6 + $0xc0] sm:$0xff] %vm93, %v1928
    %1992 = vst.msk [vmem:[%s6 + $0xc8] sm:$0xff] %vm93, %v1929
    %1993 = vst.msk [vmem:[%s6 + $0xd0] sm:$0xff] %vm93, %v1930
    %1994 = vst.msk [vmem:[%s6 + $0xd8] sm:$0xff] %vm93, %v1931
    %1995 = vst.msk [vmem:[%s6 + $0xe0] sm:$0xff] %vm93, %v1932
    %1996 = vst.msk [vmem:[%s6 + $0xe8] sm:$0xff] %vm93, %v1933
    %1997 = vst.msk [vmem:[%s6 + $0xf0] sm:$0xff] %vm93, %v1934
    %1998 = vst.msk [vmem:[%s6 + $0xf8] sm:$0xff] %vm93, %v1935
    %1999 = vst.msk [vmem:[%s6 + $0x100] sm:$0xff] %vm93, %v1936
    %2000 = vst.msk [vmem:[%s6 + $0x108] sm:$0xff] %vm93, %v1937
    %2001 = vst.msk [vmem:[%s6 + $0x110] sm:$0xff] %vm93, %v1938
    %2002 = vst.msk [vmem:[%s6 + $0x118] sm:$0xff] %vm93, %v1939
    %2003 = vst.msk [vmem:[%s6 + $0x120] sm:$0xff] %vm93, %v1940
    %2004 = vst.msk [vmem:[%s6 + $0x128] sm:$0xff] %vm93, %v1941
    %2005 = vst.msk [vmem:[%s6 + $0x130] sm:$0xff] %vm93, %v1942
    %2006 = vst.msk [vmem:[%s6 + $0x138] sm:$0xff] %vm93, %v1943
    %2007 = vst.msk [vmem:[%s6 + $0x140] sm:$0xff] %vm93, %v1944
    %2008 = vst.msk [vmem:[%s6 + $0x148] sm:$0xff] %vm93, %v1945
    %2009 = vst.msk [vmem:[%s6 + $0x150] sm:$0xff] %vm93, %v1946
    %2010 = vst.msk [vmem:[%s6 + $0x158] sm:$0xff] %vm93, %v1947
    %2011 = vst.msk [vmem:[%s6 + $0x160] sm:$0xff] %vm93, %v1948
    %2012 = vst.msk [vmem:[%s6 + $0x168] sm:$0xff] %vm93, %v1949
    %2013 = vst.msk [vmem:[%s6 + $0x170] sm:$0xff] %vm93, %v1950
    %2014 = vst.msk [vmem:[%s6 + $0x178] sm:$0xff] %vm93, %v1951
    %2015 = vst.msk [vmem:[%s6 + $0x180] sm:$0xff] %vm93, %v1952
    %2016 = vst.msk [vmem:[%s6 + $0x188] sm:$0xff] %vm93, %v1953
    %2017 = vst.msk [vmem:[%s6 + $0x190] sm:$0xff] %vm93, %v1954
    %2018 = vst.msk [vmem:[%s6 + $0x198] sm:$0xff] %vm93, %v1955
    %2019 = vst.msk [vmem:[%s6 + $0x1a0] sm:$0xff] %vm93, %v1956
    %2020 = vst.msk [vmem:[%s6 + $0x1a8] sm:$0xff] %vm93, %v1957
    %2021 = vst.msk [vmem:[%s6 + $0x1b0] sm:$0xff] %vm93, %v1958
    %2022 = vst.msk [vmem:[%s6 + $0x1b8] sm:$0xff] %vm93, %v1959
    %2023 = vst.msk [vmem:[%s6 + $0x1c0] sm:$0xff] %vm93, %v1960
    %2024 = vst.msk [vmem:[%s6 + $0x1c8] sm:$0xff] %vm93, %v1961
    %2025 = vst.msk [vmem:[%s6 + $0x1d0] sm:$0xff] %vm93, %v1962
    %2026 = vst.msk [vmem:[%s6 + $0x1d8] sm:$0xff] %vm93, %v1963
    %2027 = vst.msk [vmem:[%s6 + $0x1e0] sm:$0xff] %vm93, %v1964
    %2028 = vst.msk [vmem:[%s6 + $0x1e8] sm:$0xff] %vm93, %v1965
    %2029 = vst.msk [vmem:[%s6 + $0x1f0] sm:$0x3] %vm156, %v1966
    // Predicated region
    $region46: #{decoder_forward.3} parent=1 // pred_check
      _
    $region47: #{decoder_forward.3} parent=1 // pred_check_branch
      %2031 = sbr.rel (0) target = $region49
    $region48: #{decoder_forward.3} parent=1 // pred_region
      _
    $region49: #{decoder_forward.3} parent=1 // pred_fallthru
      _
    // Predicated region
    $region50: #{decoder_forward.3} parent=1 // pred_check
      _
    $region51: #{decoder_forward.3} parent=1 // pred_check_branch
      %2033 = sbr.rel (0) target = $region53
    $region52: #{decoder_forward.3} parent=1 // pred_region
      _
    $region53: #{decoder_forward.3} parent=1 // pred_fallthru
      _
    %2034 = vsyncpa [#allocation3], 1
    %2035 = vsyncpa [#allocation5], 1
    %2036 = vsyncpa [#allocation8], 1

</llo_original>
